<compile_context>
chip_gen: v7x
topology: tpu7x:2x2x1
jax: 0.10.0
libtpu: 0.0.40
codegen_flags: <defaults>
</compile_context>

<pallas_src>
import math
import functools
import numpy as np
import jax
import jax.numpy as jnp
from jax.experimental import pallas as pl
from jax.experimental.pallas import tpu as pltpu  # noqa: F401  (TPU-specific tuning hooks)


# ----------------------------------------------------------------------------- #
# Fused Pallas kernel: TBCNN encoder + document-attention encoder
# ----------------------------------------------------------------------------- #
def _search_fused_kernel(nodes_ref, children_ref, mask_ref, e_ref,
                         wt_ref, wr_ref, wl_ref, bconv_ref, wh_ref, bh_ref,
                         wbt_ref, lvec_ref, rvec_ref, *, max_len):
    # nodes_ref   : [B, N, F]  f32   AST node features
    # children_ref: [B, N, C]  int32 1-based child indices (0 = no child)
    # mask_ref    : [B, N]     f32   1.0 for real nodes
    # e_ref       : [B, Lp, D] f32   token embeddings; rows >= max_len are
    #                                alignment-only zero padding (masked below);
    #                                zero pad rows *within* max_len DO take part,
    #                                exactly like the PyTorch reference.
    # wt/wr/wl    : [F, Cf]    bf16  TBCNN conv weights (pre-cast at init)
    # bconv       : [1, Cf]    f32
    # wh          : [Cf, D]    bf16,  bh : [1, D] f32
    # wbt         : [D, D]     bf16  W_b transposed (pre-cast at init)
    # lvec_ref    : [B, D]     f32   TBCNN output
    # rvec_ref    : [B, D]     f32   doc-attention output

    # ----------------------------- TBCNN branch ----------------------------- #
    nodes = nodes_ref[...]                                          # [B, N, F]
    children = children_ref[...]                                    # [B, N, C]
    B, N, F = nodes.shape
    C = children.shape[2]

    # continuous-binary-tree eta coefficients (reconstruction, see TODO above)
    valid = (children > 0).astype(jnp.float32)                      # [B, N, C]
    num_sib = jnp.sum(valid, axis=2, keepdims=True)                 # [B, N, 1]
    pos_c = (jax.lax.broadcasted_iota(jnp.int32, (B, N, C), 2) + 1
             ).astype(jnp.float32)                                  # 1-based position
    denom = jnp.maximum(num_sib - 1.0, 1.0)
    eta_r = jnp.where(num_sib > 1.0, (pos_c - 1.0) / denom, 0.5) * valid
    eta_l = (1.0 - eta_r) * valid

    # Fold (gather children by index) + (eta weighting) into selection matrices:
    #   sel_x[b,n,m] = sum_c eta_x[b,n,c] * [children[b,n,c] == m+1]
    # so that combined_x = sel_x @ nodes runs on the MXU (no dynamic gather).
    node_id = jax.lax.broadcasted_iota(jnp.int32, (B, N, N), 2) + 1  # [B, N, N]
    sel_r = None
    sel_l = None
    for c in range(C):                                              # static unroll, C == 3
        hit = (children[:, :, c:c + 1] == node_id).astype(jnp.float32)   # [B, N, N]
        term_r = eta_r[:, :, c:c + 1] * hit
        term_l = eta_l[:, :, c:c + 1] * hit
        sel_r = term_r if sel_r is None else sel_r + term_r
        sel_l = term_l if sel_l is None else sel_l + term_l

    comb_r = jnp.einsum("bnm,bmf->bnf", sel_r, nodes,
                        preferred_element_type=jnp.float32)          # [B, N, F]
    comb_l = jnp.einsum("bnm,bmf->bnf", sel_l, nodes,
                        preferred_element_type=jnp.float32)          # [B, N, F]

    # conv = tanh(x_t@W_t + x_r@W_r + x_l@W_l + b) as fused [B*N, .] matmuls.
    # bf16 only at the dot boundary; accumulation / elementwise math stays f32.
    x_t = nodes.reshape(B * N, F).astype(jnp.bfloat16)
    x_r = comb_r.reshape(B * N, F).astype(jnp.bfloat16)
    x_l = comb_l.reshape(B * N, F).astype(jnp.bfloat16)
    pre = (jnp.dot(x_t, wt_ref[...], preferred_element_type=jnp.float32)
           + jnp.dot(x_r, wr_ref[...], preferred_element_type=jnp.float32)
           + jnp.dot(x_l, wl_ref[...], preferred_element_type=jnp.float32)
           + bconv_ref[...])                                         # [B*N, Cf] f32
    Cf = pre.shape[-1]
    conv3 = jnp.tanh(pre).reshape(B, N, Cf)                          # tile-aligned (N % 8 == 0)

    # masked max-pool over nodes; tanh output is in (-1,1) so -2.0 is a safe sentinel
    masked = jnp.where(mask_ref[...][:, :, None] > 0.0, conv3, -2.0)
    pooled = jnp.max(masked, axis=1)                                 # [B, Cf]
    lvec_ref[...] = jnp.tanh(
        jnp.dot(pooled.astype(jnp.bfloat16), wh_ref[...],
                preferred_element_type=jnp.float32) + bh_ref[...])   # [B, D]

    # ------------------------ Document-attention branch --------------------- #
    e = e_ref[...]                                                   # [B, Lp, D]
    Lp = e.shape[1]
    # hidden_0 = mean over the max_len padded tokens (alignment rows are zero,
    # so summing over Lp and dividing by max_len is exact).
    hd = jnp.sum(e, axis=1) * (1.0 / float(max_len))                 # [B, D]
    # v = W_b @ hd per sample  <=>  v = hd @ W_b^T  (associativity rewrite)
    v = jnp.dot(hd.astype(jnp.bfloat16), wbt_ref[...],
                preferred_element_type=jnp.float32)                  # [B, D]
    # scores[b,l] = <E[b,l,:], v[b,:]>  ==  ((E @ W_b) . hd) of the reference.
    # At L=16 / B=2 this is a couple of vregs of VALU+XLU work; an MXU einsum
    # form ('bld,bkd->blk') only pays off for much larger L.
    scores = jnp.sum(e * v[:, None, :], axis=-1)                     # [B, Lp]
    pos = jax.lax.broadcasted_iota(jnp.int32, (B, Lp), 1)
    scores = jnp.where(pos < max_len, scores, -1e30)                 # drop alignment rows
    scores = scores - jnp.max(scores, axis=1, keepdims=True)
    p = jnp.exp(scores)
    attn = p / jnp.sum(p, axis=1, keepdims=True)                     # softmax over L
    rvec_ref[...] = jnp.sum(attn[:, :, None] * e, axis=1)            # [B, D]


# ----------------------------------------------------------------------------- #
# Wrappers
# ----------------------------------------------------------------------------- #
def prepare_params(embedding, w_b, w_t, w_l, w_r, b_conv, w_h, b_h):
    """One-time parameter prep: transposes / bf16 casts hoisted out of the forward."""
    return dict(
        embedding=jnp.asarray(embedding, jnp.float32),                  # [V+1, D]
        w_b_t=jnp.asarray(w_b, jnp.float32).T.astype(jnp.bfloat16),     # [D, D]
        w_t=jnp.asarray(w_t, jnp.float32).astype(jnp.bfloat16),         # [F, Cf]
        w_r=jnp.asarray(w_r, jnp.float32).astype(jnp.bfloat16),
        w_l=jnp.asarray(w_l, jnp.float32).astype(jnp.bfloat16),
        b_conv=jnp.asarray(b_conv, jnp.float32),                        # [1, Cf]
        w_h=jnp.asarray(w_h, jnp.float32).astype(jnp.bfloat16),         # [Cf, D]
        b_h=jnp.asarray(b_h, jnp.float32),                              # [1, D]
    )


def _prep_doc_ids(x3, max_len):
    """Ragged python token-id lists -> padded [B, Lp] int32 (already +1 shifted).

    Matches the reference: truncate to max_len, pad with -1, then +1 so pads hit
    embedding row 0 (padding_idx).  Extra rows up to Lp (a sublane multiple) are
    alignment only and are masked out of the softmax in-kernel.
    """
    lp = max(8, -(-max_len // 8) * 8)                                   # 12 -> 16
    seq = []
    for doc in x3:
        doc = list(doc)[:max_len]
        seq.append([int(t) + 1 for t in doc] + [0] * (lp - len(doc)))
    return jnp.asarray(np.asarray(seq, dtype=np.int32))


@functools.partial(jax.jit, static_argnames=("max_len",))
def _fused_forward(ids, nodes, children, node_mask, params, *, max_len):
    nodes = nodes.astype(jnp.float32)
    children = children.astype(jnp.int32)
    node_mask = node_mask.astype(jnp.float32)
    # Embedding lookup stays an XLA gather fused into this jit (single dispatch).
    # TODO(synk): at a real vocabulary size keep the table in HBM
    # (memory_space=pl.ANY) and DMA only the needed rows in-kernel — a
    # VMEM-resident table would not fit v7x's 64 MiB VMEM.
    e = jnp.take(params["embedding"], ids, axis=0).astype(jnp.float32)  # [B, Lp, D]

    B = nodes.shape[0]
    D = params["b_h"].shape[1]
    lvec, rvec = pl.pallas_call(
        functools.partial(_search_fused_kernel, max_len=max_len),
        out_shape=(jax.ShapeDtypeStruct((B, D), jnp.float32),
                   jax.ShapeDtypeStruct((B, D), jnp.float32)),
    )(nodes, children, node_mask, e,
      params["w_t"], params["w_r"], params["w_l"], params["b_conv"],
      params["w_h"], params["b_h"], params["w_b_t"])
    return lvec, rvec


def search_model_forward(params, x1, x2, x3, p1):
    """SearchModel.forward -> (lvec, rvec)."""
    ids = _prep_doc_ids(x3, 12)          # max_len=12 is hard-coded in the reference forward
    return _fused_forward(ids, x1, x2, p1, params, max_len=12)


# ----------------------------------------------------------------------------- #
# Deterministic parameter / input construction and a single run
# ----------------------------------------------------------------------------- #
if __name__ == "__main__":
    B = 2                 # batch
    N = 16                # AST nodes per tree
    C = 3                 # max children per node
    feature_size = 64     # tbcnn input = feature_size * 2
    F = feature_size * 2  # 128
    conv_feature = 128
    embedding_dim = 128
    vocab_size = 100

    key = jax.random.PRNGKey(0)
    (k_emb, k_wb, k_wt, k_wl, k_wr, k_bc, k_wh, k_bh,
     k_nodes, k_children) = jax.random.split(key, 10)

    # DocumentEncoder params (nn.Embedding with padding_idx=0, xavier W_b)
    embedding = jax.random.normal(k_emb, (vocab_size + 1, embedding_dim), jnp.float32) * 0.1
    embedding = embedding.at[0].set(0.0)                               # padding row -> zeros
    xav = math.sqrt(6.0 / (embedding_dim + embedding_dim))
    w_b = jax.random.uniform(k_wb, (embedding_dim, embedding_dim),
                             jnp.float32, minval=-xav, maxval=xav)

    # TBCNN params
    w_t = jax.random.normal(k_wt, (F, conv_feature), jnp.float32) * 0.05
    w_l = jax.random.normal(k_wl, (F, conv_feature), jnp.float32) * 0.05
    w_r = jax.random.normal(k_wr, (F, conv_feature), jnp.float32) * 0.05
    b_conv = jax.random.normal(k_bc, (1, conv_feature), jnp.float32) * 0.05
    w_h = jax.random.normal(k_wh, (conv_feature, embedding_dim), jnp.float32) * 0.05
    b_h = jax.random.normal(k_bh, (1, embedding_dim), jnp.float32) * 0.05

    params = prepare_params(embedding, w_b, w_t, w_l, w_r, b_conv, w_h, b_h)

    # inputs
    x1 = jax.random.normal(k_nodes, (B, N, F), jnp.float32)                     # node features
    x2 = jax.random.randint(k_children, (B, N, C), 0, N + 1).astype(jnp.int32)  # 1-based, 0=none
    p1 = (jnp.arange(N)[None, :] < jnp.array([12, 16])[:, None]).astype(jnp.float32)  # node mask
    x3 = [[3, 7, 2, 9, 15],                                                     # short doc (padded)
          list(range(1, 20))]                                                   # long doc (truncated to 12)

    lvec, rvec = search_model_forward(params, x1, x2, x3, p1)
    jax.block_until_ready((lvec, rvec))
    assert lvec.shape == (B, embedding_dim) and rvec.shape == (B, embedding_dim)
    assert bool(jnp.all(jnp.isfinite(lvec))) and bool(jnp.all(jnp.isfinite(rvec)))
    print("KERNEL_OK")
</pallas_src>

<mosaic_0001>
module attributes {stable_mosaic.version = 11 : i64} {
  func.func @_search_fused_kernel(%arg0: memref<2x16x128xf32, #tpu.memory_space<vmem>>, %arg1: memref<2x16x3xi32, #tpu.memory_space<vmem>>, %arg2: memref<2x16xf32, #tpu.memory_space<vmem>>, %arg3: memref<2x16x128xf32, #tpu.memory_space<vmem>>, %arg4: memref<128x128xbf16, #tpu.memory_space<vmem>>, %arg5: memref<128x128xbf16, #tpu.memory_space<vmem>>, %arg6: memref<128x128xbf16, #tpu.memory_space<vmem>>, %arg7: memref<1x128xf32, #tpu.memory_space<vmem>>, %arg8: memref<128x128xbf16, #tpu.memory_space<vmem>>, %arg9: memref<1x128xf32, #tpu.memory_space<vmem>>, %arg10: memref<128x128xbf16, #tpu.memory_space<vmem>>, %arg11: memref<2x128xf32, #tpu.memory_space<vmem>>, %arg12: memref<2x128xf32, #tpu.memory_space<vmem>>) attributes {dimension_semantics = [], scalar_prefetch = 0 : i64, scratch_operands = 0 : i64, tpu.core_type = #tpu.core_type<tc>} {
    %c0 = arith.constant 0 : index
    %c0_0 = arith.constant 0 : index
    %c0_1 = arith.constant 0 : index
    %0 = vector.load %arg0[%c0, %c0_0, %c0_1] : memref<2x16x128xf32, #tpu.memory_space<vmem>>, vector<2x16x128xf32>
    %c0_2 = arith.constant 0 : index
    %c0_3 = arith.constant 0 : index
    %c0_4 = arith.constant 0 : index
    %1 = vector.load %arg1[%c0_2, %c0_3, %c0_4] : memref<2x16x3xi32, #tpu.memory_space<vmem>>, vector<2x16x3xi32>
    %c0_i32 = arith.constant 0 : i32
    %2 = vector.broadcast %c0_i32 : i32 to vector<2x16x3xi32>
    %3 = arith.cmpi sgt, %1, %2 : vector<2x16x3xi32>
    %4 = arith.extui %3 : vector<2x16x3xi1> to vector<2x16x3xi32>
    %5 = arith.sitofp %4 : vector<2x16x3xi32> to vector<2x16x3xf32>
    %cst = arith.constant dense<0.000000e+00> : vector<2x16xf32>
    %6 = vector.multi_reduction <add>, %5, %cst [2] : vector<2x16x3xf32> to vector<2x16xf32>
    %7 = vector.shape_cast %6 : vector<2x16xf32> to vector<2x16x1xf32>
    %8 = tpu.iota {dimensions = array<i32: 2>} : vector<2x16x3xi32>
    %c1_i32 = arith.constant 1 : i32
    %9 = vector.broadcast %c1_i32 : i32 to vector<2x16x3xi32>
    %10 = arith.addi %8, %9 : vector<2x16x3xi32>
    %11 = arith.sitofp %10 : vector<2x16x3xi32> to vector<2x16x3xf32>
    %cst_5 = arith.constant 1.000000e+00 : f32
    %12 = vector.broadcast %cst_5 : f32 to vector<2x16x1xf32>
    %13 = arith.subf %7, %12 : vector<2x16x1xf32>
    %cst_6 = arith.constant 1.000000e+00 : f32
    %14 = vector.broadcast %cst_6 : f32 to vector<2x16x1xf32>
    %15 = arith.maximumf %13, %14 : vector<2x16x1xf32>
    %cst_7 = arith.constant 1.000000e+00 : f32
    %16 = vector.broadcast %cst_7 : f32 to vector<2x16x1xf32>
    %17 = arith.cmpf ogt, %7, %16 : vector<2x16x1xf32>
    %cst_8 = arith.constant 1.000000e+00 : f32
    %18 = vector.broadcast %cst_8 : f32 to vector<2x16x3xf32>
    %19 = arith.subf %11, %18 : vector<2x16x3xf32>
    %20 = vector.broadcast %15 : vector<2x16x1xf32> to vector<2x16x3xf32>
    %21 = arith.divf %19, %20 : vector<2x16x3xf32>
    %cst_9 = arith.constant 5.000000e-01 : f32
    %22 = vector.shape_cast %17 : vector<2x16x1xi1> to vector<2x16x1xi1>
    %23 = vector.broadcast %22 : vector<2x16x1xi1> to vector<2x16x3xi1>
    %24 = vector.broadcast %cst_9 : f32 to vector<2x16x3xf32>
    %25 = arith.select %23, %21, %24 : vector<2x16x3xi1>, vector<2x16x3xf32>
    %26 = arith.mulf %25, %5 : vector<2x16x3xf32>
    %cst_10 = arith.constant 1.000000e+00 : f32
    %27 = vector.broadcast %cst_10 : f32 to vector<2x16x3xf32>
    %28 = arith.subf %27, %26 : vector<2x16x3xf32>
    %29 = arith.mulf %28, %5 : vector<2x16x3xf32>
    %30 = tpu.iota {dimensions = array<i32: 2>} : vector<2x16x16xi32>
    %c1_i32_11 = arith.constant 1 : i32
    %31 = vector.broadcast %c1_i32_11 : i32 to vector<2x16x16xi32>
    %32 = arith.addi %30, %31 : vector<2x16x16xi32>
    %33 = vector.extract_strided_slice %1 {offsets = [0, 0, 0], sizes = [2, 16, 1], strides = [1, 1, 1]} : vector<2x16x3xi32> to vector<2x16x1xi32>
    %34 = vector.broadcast %33 : vector<2x16x1xi32> to vector<2x16x16xi32>
    %35 = arith.cmpi eq, %34, %32 : vector<2x16x16xi32>
    %36 = arith.extui %35 : vector<2x16x16xi1> to vector<2x16x16xi32>
    %37 = arith.sitofp %36 : vector<2x16x16xi32> to vector<2x16x16xf32>
    %38 = vector.extract_strided_slice %26 {offsets = [0, 0, 0], sizes = [2, 16, 1], strides = [1, 1, 1]} : vector<2x16x3xf32> to vector<2x16x1xf32>
    %39 = vector.broadcast %38 : vector<2x16x1xf32> to vector<2x16x16xf32>
    %40 = arith.mulf %39, %37 : vector<2x16x16xf32>
    %41 = vector.extract_strided_slice %29 {offsets = [0, 0, 0], sizes = [2, 16, 1], strides = [1, 1, 1]} : vector<2x16x3xf32> to vector<2x16x1xf32>
    %42 = vector.broadcast %41 : vector<2x16x1xf32> to vector<2x16x16xf32>
    %43 = arith.mulf %42, %37 : vector<2x16x16xf32>
    %44 = vector.extract_strided_slice %1 {offsets = [0, 0, 1], sizes = [2, 16, 1], strides = [1, 1, 1]} : vector<2x16x3xi32> to vector<2x16x1xi32>
    %45 = vector.broadcast %44 : vector<2x16x1xi32> to vector<2x16x16xi32>
    %46 = arith.cmpi eq, %45, %32 : vector<2x16x16xi32>
    %47 = arith.extui %46 : vector<2x16x16xi1> to vector<2x16x16xi32>
    %48 = arith.sitofp %47 : vector<2x16x16xi32> to vector<2x16x16xf32>
    %49 = vector.extract_strided_slice %26 {offsets = [0, 0, 1], sizes = [2, 16, 1], strides = [1, 1, 1]} : vector<2x16x3xf32> to vector<2x16x1xf32>
    %50 = vector.broadcast %49 : vector<2x16x1xf32> to vector<2x16x16xf32>
    %51 = arith.mulf %50, %48 : vector<2x16x16xf32>
    %52 = vector.extract_strided_slice %29 {offsets = [0, 0, 1], sizes = [2, 16, 1], strides = [1, 1, 1]} : vector<2x16x3xf32> to vector<2x16x1xf32>
    %53 = vector.broadcast %52 : vector<2x16x1xf32> to vector<2x16x16xf32>
    %54 = arith.mulf %53, %48 : vector<2x16x16xf32>
    %55 = arith.addf %40, %51 : vector<2x16x16xf32>
    %56 = arith.addf %43, %54 : vector<2x16x16xf32>
    %57 = vector.extract_strided_slice %1 {offsets = [0, 0, 2], sizes = [2, 16, 1], strides = [1, 1, 1]} : vector<2x16x3xi32> to vector<2x16x1xi32>
    %58 = vector.broadcast %57 : vector<2x16x1xi32> to vector<2x16x16xi32>
    %59 = arith.cmpi eq, %58, %32 : vector<2x16x16xi32>
    %60 = arith.extui %59 : vector<2x16x16xi1> to vector<2x16x16xi32>
    %61 = arith.sitofp %60 : vector<2x16x16xi32> to vector<2x16x16xf32>
    %62 = vector.extract_strided_slice %26 {offsets = [0, 0, 2], sizes = [2, 16, 1], strides = [1, 1, 1]} : vector<2x16x3xf32> to vector<2x16x1xf32>
    %63 = vector.broadcast %62 : vector<2x16x1xf32> to vector<2x16x16xf32>
    %64 = arith.mulf %63, %61 : vector<2x16x16xf32>
    %65 = vector.extract_strided_slice %29 {offsets = [0, 0, 2], sizes = [2, 16, 1], strides = [1, 1, 1]} : vector<2x16x3xf32> to vector<2x16x1xf32>
    %66 = vector.broadcast %65 : vector<2x16x1xf32> to vector<2x16x16xf32>
    %67 = arith.mulf %66, %61 : vector<2x16x16xf32>
    %68 = arith.addf %55, %64 : vector<2x16x16xf32>
    %69 = arith.addf %56, %67 : vector<2x16x16xf32>
    "tpu.trace_start"() <{level = 10 : i32, message = "bnm,bmf->bnf"}> : () -> ()
    %cst_12 = arith.constant dense<0.000000e+00> : vector<2x16x128xf32>
    %70 = tpu.matmul %68, %0, %cst_12 {dimension_numbers = #tpu.dot_dimension_numbers<[2], [1], [1], [2], [0, 0, 0, 1, 1, 2], [0], [0]>} : vector<2x16x16xf32>, vector<2x16x128xf32>, vector<2x16x128xf32> -> vector<2x16x128xf32>
    %cst_13 = arith.constant dense<0.000000e+00> : vector<2x16x128xf32>
    %71 = tpu.matmul %69, %0, %cst_13 {dimension_numbers = #tpu.dot_dimension_numbers<[2], [1], [1], [2], [0, 0, 0, 1, 1, 2], [0], [0]>} : vector<2x16x16xf32>, vector<2x16x128xf32>, vector<2x16x128xf32> -> vector<2x16x128xf32>
    "tpu.trace_stop"() : () -> ()
    %72 = vector.shape_cast %0 : vector<2x16x128xf32> to vector<32x128xf32>
    %73 = arith.truncf %72 : vector<32x128xf32> to vector<32x128xbf16>
    %74 = vector.shape_cast %70 : vector<2x16x128xf32> to vector<32x128xf32>
    %75 = arith.truncf %74 : vector<32x128xf32> to vector<32x128xbf16>
    %76 = vector.shape_cast %71 : vector<2x16x128xf32> to vector<32x128xf32>
    %77 = arith.truncf %76 : vector<32x128xf32> to vector<32x128xbf16>
    %c0_14 = arith.constant 0 : index
    %c0_15 = arith.constant 0 : index
    %78 = vector.load %arg4[%c0_14, %c0_15] : memref<128x128xbf16, #tpu.memory_space<vmem>>, vector<128x128xbf16>
    %cst_16 = arith.constant dense<0.000000e+00> : vector<32x128xf32>
    %79 = tpu.matmul %73, %78, %cst_16 {dimension_numbers = #tpu.dot_dimension_numbers<[1], [0], [0], [1], [0, 0, 1, 1], [], []>} : vector<32x128xbf16>, vector<128x128xbf16>, vector<32x128xf32> -> vector<32x128xf32>
    %c0_17 = arith.constant 0 : index
    %c0_18 = arith.constant 0 : index
    %80 = vector.load %arg5[%c0_17, %c0_18] : memref<128x128xbf16, #tpu.memory_space<vmem>>, vector<128x128xbf16>
    %cst_19 = arith.constant dense<0.000000e+00> : vector<32x128xf32>
    %81 = tpu.matmul %75, %80, %cst_19 {dimension_numbers = #tpu.dot_dimension_numbers<[1], [0], [0], [1], [0, 0, 1, 1], [], []>} : vector<32x128xbf16>, vector<128x128xbf16>, vector<32x128xf32> -> vector<32x128xf32>
    %82 = arith.addf %79, %81 : vector<32x128xf32>
    %c0_20 = arith.constant 0 : index
    %c0_21 = arith.constant 0 : index
    %83 = vector.load %arg6[%c0_20, %c0_21] : memref<128x128xbf16, #tpu.memory_space<vmem>>, vector<128x128xbf16>
    %cst_22 = arith.constant dense<0.000000e+00> : vector<32x128xf32>
    %84 = tpu.matmul %77, %83, %cst_22 {dimension_numbers = #tpu.dot_dimension_numbers<[1], [0], [0], [1], [0, 0, 1, 1], [], []>} : vector<32x128xbf16>, vector<128x128xbf16>, vector<32x128xf32> -> vector<32x128xf32>
    %85 = arith.addf %82, %84 : vector<32x128xf32>
    %c0_23 = arith.constant 0 : index
    %c0_24 = arith.constant 0 : index
    %86 = vector.load %arg7[%c0_23, %c0_24] : memref<1x128xf32, #tpu.memory_space<vmem>>, vector<1x128xf32>
    %87 = vector.broadcast %86 : vector<1x128xf32> to vector<32x128xf32>
    %88 = arith.addf %85, %87 : vector<32x128xf32>
    %89 = math.tanh %88 : vector<32x128xf32>
    %90 = vector.shape_cast %89 : vector<32x128xf32> to vector<2x16x128xf32>
    %c0_25 = arith.constant 0 : index
    %c0_26 = arith.constant 0 : index
    %91 = vector.load %arg2[%c0_25, %c0_26] : memref<2x16xf32, #tpu.memory_space<vmem>>, vector<2x16xf32>
    %92 = vector.shape_cast %91 : vector<2x16xf32> to vector<2x16x1xf32>
    %cst_27 = arith.constant 0.000000e+00 : f32
    %93 = vector.broadcast %cst_27 : f32 to vector<2x16x1xf32>
    %94 = arith.cmpf ogt, %92, %93 : vector<2x16x1xf32>
    %cst_28 = arith.constant -2.000000e+00 : f32
    %95 = vector.shape_cast %94 : vector<2x16x1xi1> to vector<2x16x1xi1>
    %96 = vector.broadcast %95 : vector<2x16x1xi1> to vector<2x16x128xi1>
    %97 = vector.broadcast %cst_28 : f32 to vector<2x16x128xf32>
    %98 = arith.select %96, %90, %97 : vector<2x16x128xi1>, vector<2x16x128xf32>
    %cst_29 = arith.constant dense<0xFF800000> : vector<2x128xf32>
    %99 = vector.multi_reduction <maximumf>, %98, %cst_29 [1] : vector<2x16x128xf32> to vector<2x128xf32>
    %100 = arith.truncf %99 : vector<2x128xf32> to vector<2x128xbf16>
    %c0_30 = arith.constant 0 : index
    %c0_31 = arith.constant 0 : index
    %101 = vector.load %arg8[%c0_30, %c0_31] : memref<128x128xbf16, #tpu.memory_space<vmem>>, vector<128x128xbf16>
    %cst_32 = arith.constant dense<0.000000e+00> : vector<2x128xf32>
    %102 = tpu.matmul %100, %101, %cst_32 {dimension_numbers = #tpu.dot_dimension_numbers<[1], [0], [0], [1], [0, 0, 1, 1], [], []>} : vector<2x128xbf16>, vector<128x128xbf16>, vector<2x128xf32> -> vector<2x128xf32>
    %c0_33 = arith.constant 0 : index
    %c0_34 = arith.constant 0 : index
    %103 = vector.load %arg9[%c0_33, %c0_34] : memref<1x128xf32, #tpu.memory_space<vmem>>, vector<1x128xf32>
    %104 = vector.broadcast %103 : vector<1x128xf32> to vector<2x128xf32>
    %105 = arith.addf %102, %104 : vector<2x128xf32>
    %106 = math.tanh %105 : vector<2x128xf32>
    %c0_35 = arith.constant 0 : index
    %c0_36 = arith.constant 0 : index
    %107 = vector.load %arg11[%c0_35, %c0_36] : memref<2x128xf32, #tpu.memory_space<vmem>>, vector<2x128xf32>
    tpu.vector_store %arg11[%c0_35, %c0_36], %106 {strides = array<i32>} : memref<2x128xf32, #tpu.memory_space<vmem>>, vector<2x128xf32>,
    %c0_37 = arith.constant 0 : index
    %c0_38 = arith.constant 0 : index
    %c0_39 = arith.constant 0 : index
    %108 = vector.load %arg3[%c0_37, %c0_38, %c0_39] : memref<2x16x128xf32, #tpu.memory_space<vmem>>, vector<2x16x128xf32>
    %cst_40 = arith.constant dense<0.000000e+00> : vector<2x128xf32>
    %109 = vector.multi_reduction <add>, %108, %cst_40 [1] : vector<2x16x128xf32> to vector<2x128xf32>
    %cst_41 = arith.constant 0.0833333358 : f32
    %110 = vector.broadcast %cst_41 : f32 to vector<2x128xf32>
    %111 = arith.mulf %109, %110 : vector<2x128xf32>
    %112 = arith.truncf %111 : vector<2x128xf32> to vector<2x128xbf16>
    %c0_42 = arith.constant 0 : index
    %c0_43 = arith.constant 0 : index
    %113 = vector.load %arg10[%c0_42, %c0_43] : memref<128x128xbf16, #tpu.memory_space<vmem>>, vector<128x128xbf16>
    %cst_44 = arith.constant dense<0.000000e+00> : vector<2x128xf32>
    %114 = tpu.matmul %112, %113, %cst_44 {dimension_numbers = #tpu.dot_dimension_numbers<[1], [0], [0], [1], [0, 0, 1, 1], [], []>} : vector<2x128xbf16>, vector<128x128xbf16>, vector<2x128xf32> -> vector<2x128xf32>
    %115 = vector.shape_cast %114 : vector<2x128xf32> to vector<2x1x128xf32>
    %116 = vector.broadcast %115 : vector<2x1x128xf32> to vector<2x16x128xf32>
    %117 = arith.mulf %108, %116 : vector<2x16x128xf32>
    %cst_45 = arith.constant dense<0.000000e+00> : vector<2x16xf32>
    %118 = vector.multi_reduction <add>, %117, %cst_45 [2] : vector<2x16x128xf32> to vector<2x16xf32>
    %119 = tpu.iota {dimensions = array<i32: 1>} : vector<2x16xi32>
    %c12_i32 = arith.constant 12 : i32
    %120 = vector.broadcast %c12_i32 : i32 to vector<2x16xi32>
    %121 = arith.cmpi slt, %119, %120 : vector<2x16xi32>
    %cst_46 = arith.constant -1.000000e+30 : f32
    %122 = vector.broadcast %cst_46 : f32 to vector<2x16xf32>
    %123 = arith.select %121, %118, %122 : vector<2x16xi1>, vector<2x16xf32>
    %cst_47 = arith.constant dense<0xFF800000> : vector<2xf32>
    %124 = vector.multi_reduction <maximumf>, %123, %cst_47 [1] : vector<2x16xf32> to vector<2xf32>
    %125 = vector.shape_cast %124 : vector<2xf32> to vector<2x1xf32>
    %126 = vector.broadcast %125 : vector<2x1xf32> to vector<2x16xf32>
    %127 = arith.subf %123, %126 : vector<2x16xf32>
    %128 = math.exp %127 : vector<2x16xf32>
    %cst_48 = arith.constant dense<0.000000e+00> : vector<2xf32>
    %129 = vector.multi_reduction <add>, %128, %cst_48 [1] : vector<2x16xf32> to vector<2xf32>
    %130 = vector.shape_cast %129 : vector<2xf32> to vector<2x1xf32>
    %131 = vector.broadcast %130 : vector<2x1xf32> to vector<2x16xf32>
    %132 = arith.divf %128, %131 : vector<2x16xf32>
    %133 = vector.shape_cast %132 : vector<2x16xf32> to vector<2x16x1xf32>
    %134 = vector.broadcast %133 : vector<2x16x1xf32> to vector<2x16x128xf32>
    %135 = arith.mulf %134, %108 : vector<2x16x128xf32>
    %cst_49 = arith.constant dense<0.000000e+00> : vector<2x128xf32>
    %136 = vector.multi_reduction <add>, %135, %cst_49 [1] : vector<2x16x128xf32> to vector<2x128xf32>
    %c0_50 = arith.constant 0 : index
    %c0_51 = arith.constant 0 : index
    %137 = vector.load %arg12[%c0_50, %c0_51] : memref<2x128xf32, #tpu.memory_space<vmem>>, vector<2x128xf32>
    tpu.vector_store %arg12[%c0_50, %c0_51], %136 {strides = array<i32>} : memref<2x128xf32, #tpu.memory_space<vmem>>, vector<2x128xf32>,
    return
  }
}

</mosaic_0001>

<llo_original>
// kernel: _fused_forward.1
$region0: #{_fused_forward.1}
  #allocation0 [shape = 'u32[]', space=smem, size = 0x4, offset = 0x4, fixed_abs, tag = 'smem constant byte address 0x4 - core index']
  #allocation1 [shape = 'u32[144,128]{1,0:T(1,128)}', space=vmem, size = 0x12000, scoped, tag = 'internal scratch']
  %s0 = inlined_call_operand.vmem [shape: f32[2,16,128], index: 0, kind: input, shape index: {}]
  %s1 = inlined_call_operand.vmem [shape: s32[2,16,3], index: 1, kind: input, shape index: {}]
  %s2 = inlined_call_operand.vmem [shape: f32[2,16], index: 2, kind: input, shape index: {}]
  %s3 = inlined_call_operand.vmem [shape: f32[2,16,128], index: 3, kind: input, shape index: {}]
  %s4 = inlined_call_operand.vmem [shape: bf16[128,128], index: 4, kind: input, shape index: {}]
  %s5 = inlined_call_operand.vmem [shape: bf16[128,128], index: 5, kind: input, shape index: {}]
  %s6 = inlined_call_operand.vmem [shape: bf16[128,128], index: 6, kind: input, shape index: {}]
  %s7 = inlined_call_operand.vmem [shape: f32[1,128], index: 7, kind: input, shape index: {}]
  %s8 = inlined_call_operand.vmem [shape: bf16[128,128], index: 8, kind: input, shape index: {}]
  %s9 = inlined_call_operand.vmem [shape: f32[1,128], index: 9, kind: input, shape index: {}]
  %s10 = inlined_call_operand.vmem [shape: bf16[128,128], index: 10, kind: input, shape index: {}]
  %s11 = inlined_call_operand.hbm [shape: f32[2,128], index: 11, kind: output, shape index: {0}]
  %s12 = inlined_call_operand.hbm [shape: f32[2,128], index: 12, kind: output, shape index: {1}]
  %13 = xla_tuple %s11, %s12
  %s14 = sld [smem:[#allocation0]]
  $region62: #{_fused_forward.1} parent=0
    _
  %s16 = ssub.s32 1, %s14
  %s17 = scalar_select 0, %s16, %s14
  $region1: #{_fused_forward.1} parent=0
    #allocation2 [shape = 'u8[1024]{0}', space=vmem, size = 0x400, scoped, tag = 'output window, operand 0, single buffered']
    #allocation3 [shape = 's32[1]{0}', space=sflag, size = 0x4, scoped, tag = 'scoped memory for _fused_forward.1']
    #allocation4 [shape = 'u8[1024]{0}', space=vmem, size = 0x400, scoped, tag = 'output window, operand 1, single buffered']
    #allocation5 [shape = 's32[1]{0}', space=sflag, size = 0x4, scoped, tag = 'scoped memory for _fused_forward.1']
    %18 = vsyncpa [#allocation3], 0
    %19 = vsyncpa [#allocation5], 0
    // Predicated region
    $region2: #{_fused_forward.1} parent=1 // pred_check
      _
    $region3: #{_fused_forward.1} parent=1 // pred_check_branch
      %21 = sbr.rel (0) target = $region5
    $region4: #{_fused_forward.1} parent=1 // pred_region
      _
    $region5: #{_fused_forward.1} parent=1 // pred_fallthru
      _
    // Predicated region
    $region6: #{_fused_forward.1} parent=1 // pred_check
      _
    $region7: #{_fused_forward.1} parent=1 // pred_check_branch
      %23 = sbr.rel (0) target = $region9
    $region8: #{_fused_forward.1} parent=1 // pred_region
      _
    $region9: #{_fused_forward.1} parent=1 // pred_fallthru
      _
    // Predicated region
    $region10: #{_fused_forward.1} parent=1 // pred_check
      _
    $region11: #{_fused_forward.1} parent=1 // pred_check_branch
      %25 = sbr.rel (0) target = $region13
    $region12: #{_fused_forward.1} parent=1 // pred_region
      _
    $region13: #{_fused_forward.1} parent=1 // pred_fallthru
      _
    // Predicated region
    $region14: #{_fused_forward.1} parent=1 // pred_check
      _
    $region15: #{_fused_forward.1} parent=1 // pred_check_branch
      %27 = sbr.rel (0) target = $region17
    $region16: #{_fused_forward.1} parent=1 // pred_region
      _
    $region17: #{_fused_forward.1} parent=1 // pred_fallthru
      _
    // Predicated region
    $region18: #{_fused_forward.1} parent=1 // pred_check
      _
    $region19: #{_fused_forward.1} parent=1 // pred_check_branch
      %29 = sbr.rel (0) target = $region21
    $region20: #{_fused_forward.1} parent=1 // pred_region
      _
    $region21: #{_fused_forward.1} parent=1 // pred_fallthru
      _
    // Predicated region
    $region22: #{_fused_forward.1} parent=1 // pred_check
      _
    $region23: #{_fused_forward.1} parent=1 // pred_check_branch
      %31 = sbr.rel (0) target = $region25
    $region24: #{_fused_forward.1} parent=1 // pred_region
      _
    $region25: #{_fused_forward.1} parent=1 // pred_fallthru
      _
    // Predicated region
    $region26: #{_fused_forward.1} parent=1 // pred_check
      _
    $region27: #{_fused_forward.1} parent=1 // pred_check_branch
      %33 = sbr.rel (0) target = $region29
    $region28: #{_fused_forward.1} parent=1 // pred_region
      _
    $region29: #{_fused_forward.1} parent=1 // pred_fallthru
      _
    // Predicated region
    $region30: #{_fused_forward.1} parent=1 // pred_check
      _
    $region31: #{_fused_forward.1} parent=1 // pred_check_branch
      %35 = sbr.rel (0) target = $region33
    $region32: #{_fused_forward.1} parent=1 // pred_region
      _
    $region33: #{_fused_forward.1} parent=1 // pred_fallthru
      _
    // Predicated region
    $region34: #{_fused_forward.1} parent=1 // pred_check
      _
    $region35: #{_fused_forward.1} parent=1 // pred_check_branch
      %37 = sbr.rel (0) target = $region37
    $region36: #{_fused_forward.1} parent=1 // pred_region
      _
    $region37: #{_fused_forward.1} parent=1 // pred_fallthru
      _
    // Predicated region
    $region38: #{_fused_forward.1} parent=1 // pred_check
      _
    $region39: #{_fused_forward.1} parent=1 // pred_check_branch
      %39 = sbr.rel (0) target = $region41
    $region40: #{_fused_forward.1} parent=1 // pred_region
      _
    $region41: #{_fused_forward.1} parent=1 // pred_fallthru
      _
    // Predicated region
    $region42: #{_fused_forward.1} parent=1 // pred_check
      _
    $region43: #{_fused_forward.1} parent=1 // pred_check_branch
      %41 = sbr.rel (0) target = $region45
    $region44: #{_fused_forward.1} parent=1 // pred_region
      _
    $region45: #{_fused_forward.1} parent=1 // pred_fallthru
      _
    %v43 = vld [vmem:[%s0] sm:$0xff]
    %v44 = vld [vmem:[%s0 + $0x8] sm:$0xff]
    %v45 = vld [vmem:[%s0 + $0x10] sm:$0xff]
    %v46 = vld [vmem:[%s0 + $0x18] sm:$0xff]
    %v47 = vld [vmem:[%s1] sm:$0xff]
    %v48 = vld [vmem:[%s1 + $0x8] sm:$0xff]
    %v49 = vld [vmem:[%s1 + $0x10] sm:$0xff]
    %v50 = vld [vmem:[%s1 + $0x18] sm:$0xff]
    %vm51 = vcmp.gt.s32.totalorder %v47, 0
    %vm52 = vcmp.gt.s32.totalorder %v48, 0
    %vm53 = vcmp.gt.s32.totalorder %v49, 0
    %vm54 = vcmp.gt.s32.totalorder %v50, 0
    %v55 = vsel %vm51, 1, 0
    %v56 = vsel %vm52, 1, 0
    %v57 = vsel %vm53, 1, 0
    %v58 = vsel %vm54, 1, 0
    %v59 = vcvt.s32.f32 %v55
    %v60 = vcvt.s32.f32 %v56
    %v61 = vcvt.s32.f32 %v57
    %v62 = vcvt.s32.f32 %v58
    %vm63 = vcmask 23552
    %v64 = vsel %vm63, %v59, 0.0
    %65 = vadd.xlane.f32.xlu0 %v64
    %v66 = vpop.xlane.xlu0 %65
    %v67 = vsel %vm63, %v60, 0.0
    %68 = vadd.xlane.f32.xlu0 %v67
    %v69 = vpop.xlane.xlu0 %68
    %v70 = vsel %vm63, %v61, 0.0
    %71 = vadd.xlane.f32.xlu0 %v70
    %v72 = vpop.xlane.xlu0 %71
    %v73 = vsel %vm63, %v62, 0.0
    %74 = vadd.xlane.f32.xlu0 %v73
    %v75 = vpop.xlane.xlu0 %74
    %v76 = vlaneseq
    %v77 = vand.u32 %v76, 127
    %v78 = vadd.s32 %v77, 1
    %v79 = vcvt.s32.f32 %v78
    %v80 = vsub.f32 %v66, 1.0
    %v81 = vsub.f32 %v69, 1.0
    %v82 = vsub.f32 %v72, 1.0
    %v83 = vsub.f32 %v75, 1.0
    %v84 = vmax.f32 %v80, 1.0
    %v85 = vmax.f32 %v81, 1.0
    %v86 = vmax.f32 %v82, 1.0
    %v87 = vmax.f32 %v83, 1.0
    %vm88 = vcmp.gt.f32.partialorder %v66, 1.0
    %vm89 = vcmp.gt.f32.partialorder %v69, 1.0
    %vm90 = vcmp.gt.f32.partialorder %v72, 1.0
    %vm91 = vcmp.gt.f32.partialorder %v75, 1.0
    %v92 = vsub.f32 %v79, 1.0
    %v93 = vrcp.pop %v84
    %v94 = vmul.f32 %v92, %v93
    %v95 = vrcp.pop %v85
    %v96 = vmul.f32 %v92, %v95
    %v97 = vrcp.pop %v86
    %v98 = vmul.f32 %v92, %v97
    %v99 = vrcp.pop %v87
    %v100 = vmul.f32 %v92, %v99
    %v101 = vsel %vm88, 1, 0
    %v102 = vsel %vm89, 1, 0
    %v103 = vsel %vm90, 1, 0
    %v104 = vsel %vm91, 1, 0
    %vm105 = vcmp.eq.s32.totalorder %v101, 1
    %vm106 = vcmp.eq.s32.totalorder %v102, 1
    %vm107 = vcmp.eq.s32.totalorder %v103, 1
    %vm108 = vcmp.eq.s32.totalorder %v104, 1
    %v109 = vsel %vm105, %v94, 0.5
    %v110 = vsel %vm106, %v96, 0.5
    %v111 = vsel %vm107, %v98, 0.5
    %v112 = vsel %vm108, %v100, 0.5
    %v113 = vmul.f32 %v109, %v59
    %v114 = vmul.f32 %v110, %v60
    %v115 = vmul.f32 %v111, %v61
    %v116 = vmul.f32 %v112, %v62
    %v117 = vsub.f32 1.0, %v113
    %v118 = vsub.f32 1.0, %v114
    %v119 = vsub.f32 1.0, %v115
    %v120 = vsub.f32 1.0, %v116
    %v121 = vmul.f32 %v117, %v59
    %v122 = vmul.f32 %v118, %v60
    %v123 = vmul.f32 %v119, %v61
    %v124 = vmul.f32 %v120, %v62
    %125 = vset.pattern.permute.xlu0 0
    %126 = vperm.xlu0 %125, %v47
    %v127 = vpop.permute.xlu0 %126
    %128 = vset.pattern.permute.xlu0 0
    %129 = vperm.xlu0 %128, %v48
    %v130 = vpop.permute.xlu0 %129
    %131 = vset.pattern.permute.xlu0 0
    %132 = vperm.xlu0 %131, %v49
    %v133 = vpop.permute.xlu0 %132
    %134 = vset.pattern.permute.xlu0 0
    %135 = vperm.xlu0 %134, %v50
    %v136 = vpop.permute.xlu0 %135
    %vm137 = vcmp.eq.s32.totalorder %v127, %v78
    %vm138 = vcmp.eq.s32.totalorder %v130, %v78
    %vm139 = vcmp.eq.s32.totalorder %v133, %v78
    %vm140 = vcmp.eq.s32.totalorder %v136, %v78
    %v141 = vsel %vm137, 1, 0
    %v142 = vsel %vm138, 1, 0
    %v143 = vsel %vm139, 1, 0
    %v144 = vsel %vm140, 1, 0
    %v145 = vcvt.s32.f32 %v141
    %v146 = vcvt.s32.f32 %v142
    %v147 = vcvt.s32.f32 %v143
    %v148 = vcvt.s32.f32 %v144
    %150 = vset.pattern.permute.xlu0 0
    %151 = vperm.xlu0 %150, %v113
    %v152 = vpop.permute.xlu0 %151
    %155 = vset.pattern.permute.xlu0 0
    %156 = vperm.xlu0 %155, %v114
    %v157 = vpop.permute.xlu0 %156
    %160 = vset.pattern.permute.xlu0 0
    %161 = vperm.xlu0 %160, %v115
    %v162 = vpop.permute.xlu0 %161
    %165 = vset.pattern.permute.xlu0 0
    %166 = vperm.xlu0 %165, %v116
    %v167 = vpop.permute.xlu0 %166
    %v169 = vmul.f32 %v152, %v145
    %v170 = vmul.f32 %v157, %v146
    %v171 = vmul.f32 %v162, %v147
    %v172 = vmul.f32 %v167, %v148
    %174 = vset.pattern.permute.xlu0 0
    %175 = vperm.xlu0 %174, %v121
    %v176 = vpop.permute.xlu0 %175
    %179 = vset.pattern.permute.xlu0 0
    %180 = vperm.xlu0 %179, %v122
    %v181 = vpop.permute.xlu0 %180
    %184 = vset.pattern.permute.xlu0 0
    %185 = vperm.xlu0 %184, %v123
    %v186 = vpop.permute.xlu0 %185
    %189 = vset.pattern.permute.xlu0 0
    %190 = vperm.xlu0 %189, %v124
    %v191 = vpop.permute.xlu0 %190
    %v193 = vmul.f32 %v176, %v145
    %v194 = vmul.f32 %v181, %v146
    %v195 = vmul.f32 %v186, %v147
    %v196 = vmul.f32 %v191, %v148
    %197 = vset.pattern.permute.xlu0 1
    %198 = vperm.xlu0 %197, %v47
    %v199 = vpop.permute.xlu0 %198
    %200 = vset.pattern.permute.xlu0 1
    %201 = vperm.xlu0 %200, %v48
    %v202 = vpop.permute.xlu0 %201
    %203 = vset.pattern.permute.xlu0 1
    %204 = vperm.xlu0 %203, %v49
    %v205 = vpop.permute.xlu0 %204
    %206 = vset.pattern.permute.xlu0 1
    %207 = vperm.xlu0 %206, %v50
    %v208 = vpop.permute.xlu0 %207
    %vm209 = vcmp.eq.s32.totalorder %v199, %v78
    %vm210 = vcmp.eq.s32.totalorder %v202, %v78
    %vm211 = vcmp.eq.s32.totalorder %v205, %v78
    %vm212 = vcmp.eq.s32.totalorder %v208, %v78
    %v213 = vsel %vm209, 1, 0
    %v214 = vsel %vm210, 1, 0
    %v215 = vsel %vm211, 1, 0
    %v216 = vsel %vm212, 1, 0
    %v217 = vcvt.s32.f32 %v213
    %v218 = vcvt.s32.f32 %v214
    %v219 = vcvt.s32.f32 %v215
    %v220 = vcvt.s32.f32 %v216
    %221 = vset.pattern.permute.xlu0 1
    %222 = vperm.xlu0 %221, %v113
    %v223 = vpop.permute.xlu0 %222
    %225 = vset.pattern.permute.xlu0 1
    %226 = vperm.xlu0 %225, %v114
    %v227 = vpop.permute.xlu0 %226
    %229 = vset.pattern.permute.xlu0 1
    %230 = vperm.xlu0 %229, %v115
    %v231 = vpop.permute.xlu0 %230
    %233 = vset.pattern.permute.xlu0 1
    %234 = vperm.xlu0 %233, %v116
    %v235 = vpop.permute.xlu0 %234
    %v237 = vmul.f32 %v223, %v217
    %v238 = vmul.f32 %v227, %v218
    %v239 = vmul.f32 %v231, %v219
    %v240 = vmul.f32 %v235, %v220
    %241 = vset.pattern.permute.xlu0 1
    %242 = vperm.xlu0 %241, %v121
    %v243 = vpop.permute.xlu0 %242
    %245 = vset.pattern.permute.xlu0 1
    %246 = vperm.xlu0 %245, %v122
    %v247 = vpop.permute.xlu0 %246
    %249 = vset.pattern.permute.xlu0 1
    %250 = vperm.xlu0 %249, %v123
    %v251 = vpop.permute.xlu0 %250
    %253 = vset.pattern.permute.xlu0 1
    %254 = vperm.xlu0 %253, %v124
    %v255 = vpop.permute.xlu0 %254
    %v257 = vmul.f32 %v243, %v217
    %v258 = vmul.f32 %v247, %v218
    %v259 = vmul.f32 %v251, %v219
    %v260 = vmul.f32 %v255, %v220
    %v261 = vadd.f32 %v169, %v237
    %v262 = vadd.f32 %v170, %v238
    %v263 = vadd.f32 %v171, %v239
    %v264 = vadd.f32 %v172, %v240
    %v265 = vadd.f32 %v193, %v257
    %v266 = vadd.f32 %v194, %v258
    %v267 = vadd.f32 %v195, %v259
    %v268 = vadd.f32 %v196, %v260
    %269 = vset.pattern.permute.xlu0 2
    %270 = vperm.xlu0 %269, %v47
    %v271 = vpop.permute.xlu0 %270
    %272 = vset.pattern.permute.xlu0 2
    %273 = vperm.xlu0 %272, %v48
    %v274 = vpop.permute.xlu0 %273
    %275 = vset.pattern.permute.xlu0 2
    %276 = vperm.xlu0 %275, %v49
    %v277 = vpop.permute.xlu0 %276
    %278 = vset.pattern.permute.xlu0 2
    %279 = vperm.xlu0 %278, %v50
    %v280 = vpop.permute.xlu0 %279
    %vm281 = vcmp.eq.s32.totalorder %v271, %v78
    %vm282 = vcmp.eq.s32.totalorder %v274, %v78
    %vm283 = vcmp.eq.s32.totalorder %v277, %v78
    %vm284 = vcmp.eq.s32.totalorder %v280, %v78
    %v285 = vsel %vm281, 1, 0
    %v286 = vsel %vm282, 1, 0
    %v287 = vsel %vm283, 1, 0
    %v288 = vsel %vm284, 1, 0
    %v289 = vcvt.s32.f32 %v285
    %v290 = vcvt.s32.f32 %v286
    %v291 = vcvt.s32.f32 %v287
    %v292 = vcvt.s32.f32 %v288
    %293 = vset.pattern.permute.xlu0 2
    %294 = vperm.xlu0 %293, %v113
    %v295 = vpop.permute.xlu0 %294
    %297 = vset.pattern.permute.xlu0 2
    %298 = vperm.xlu0 %297, %v114
    %v299 = vpop.permute.xlu0 %298
    %301 = vset.pattern.permute.xlu0 2
    %302 = vperm.xlu0 %301, %v115
    %v303 = vpop.permute.xlu0 %302
    %305 = vset.pattern.permute.xlu0 2
    %306 = vperm.xlu0 %305, %v116
    %v307 = vpop.permute.xlu0 %306
    %v309 = vmul.f32 %v295, %v289
    %v310 = vmul.f32 %v299, %v290
    %v311 = vmul.f32 %v303, %v291
    %v312 = vmul.f32 %v307, %v292
    %313 = vset.pattern.permute.xlu0 2
    %314 = vperm.xlu0 %313, %v121
    %v315 = vpop.permute.xlu0 %314
    %317 = vset.pattern.permute.xlu0 2
    %318 = vperm.xlu0 %317, %v122
    %v319 = vpop.permute.xlu0 %318
    %321 = vset.pattern.permute.xlu0 2
    %322 = vperm.xlu0 %321, %v123
    %v323 = vpop.permute.xlu0 %322
    %325 = vset.pattern.permute.xlu0 2
    %326 = vperm.xlu0 %325, %v124
    %v327 = vpop.permute.xlu0 %326
    %v329 = vmul.f32 %v315, %v289
    %v330 = vmul.f32 %v319, %v290
    %v331 = vmul.f32 %v323, %v291
    %v332 = vmul.f32 %v327, %v292
    %v333 = vadd.f32 %v261, %v309
    %v334 = vadd.f32 %v262, %v310
    %v335 = vadd.f32 %v263, %v311
    %v336 = vadd.f32 %v264, %v312
    %v337 = vadd.f32 %v265, %v329
    %v338 = vadd.f32 %v266, %v330
    %v339 = vadd.f32 %v267, %v331
    %v340 = vadd.f32 %v268, %v332
    %vm341 = vcmask 130048
    %v343 = vsel %vm341, %v333, 0
    %v346 = vsel %vm341, %v334, 0
    %348 = vmatprep.subr.mxu0 0.0
    %349 = vmatpush1.msra.mxu0 %v43
    %350 = vmatprep.subr.mxu0 0.0
    %351 = vmatpush1.msra.mxu0 %v44
    %352 = vmatprep.subr.mxu0 0.0
    %353 = vmatpush1.msra.mxu0 0.0
    %354 = vmatprep.subr.mxu0 0.0
    %355 = vmatpush1.msra.mxu0 0.0
    %356 = vmatprep.subr.mxu0 0.0
    %357 = vmatpush1.msra.mxu0 0.0
    %358 = vmatprep.subr.mxu0 0.0
    %359 = vmatpush1.msra.mxu0 0.0
    %360 = vmatprep.subr.mxu0 0.0
    %361 = vmatpush1.msra.mxu0 0.0
    %362 = vmatprep.subr.mxu0 0.0
    %363 = vmatpush1.msra.mxu0 0.0
    %364 = vmatprep.subr.mxu0 0.0
    %365 = vmatpush1.msra.mxu0 0.0
    %366 = vmatprep.subr.mxu0 0.0
    %367 = vmatpush1.msra.mxu0 0.0
    %368 = vmatprep.subr.mxu0 0.0
    %369 = vmatpush1.msra.mxu0 0.0
    %370 = vmatprep.subr.mxu0 0.0
    %371 = vmatpush1.msra.mxu0 0.0
    %372 = vmatprep.subr.mxu0 0.0
    %373 = vmatpush1.msra.mxu0 0.0
    %374 = vmatprep.subr.mxu0 0.0
    %375 = vmatpush1.msra.mxu0 0.0
    %376 = vmatprep.subr.mxu0 0.0
    %377 = vmatpush1.msra.mxu0 0.0
    %378 = vmatprep.subr.mxu0 0.0
    %379 = vmatpush1.msra.mxu0 0.0
    %380 = vmatprep.subr.mxu0 0.0
    %381 = vmatpush1.msra.mxu0 0.0
    %382 = vmatprep.subr.mxu0 0.0
    %383 = vmatpush1.msra.mxu0 0.0
    %384 = vmatprep.subr.mxu0 0.0
    %385 = vmatpush1.msra.mxu0 0.0
    %386 = vmatprep.subr.mxu0 0.0
    %387 = vmatpush1.msra.mxu0 0.0
    %388 = vmatprep.subr.mxu0 0.0
    %389 = vmatpush1.msra.mxu0 0.0
    %390 = vmatprep.subr.mxu0 0.0
    %391 = vmatpush1.msra.mxu0 0.0
    %392 = vmatprep.subr.mxu0 0.0
    %393 = vmatpush1.msra.mxu0 0.0
    %394 = vmatprep.subr.mxu0 0.0
    %395 = vmatpush1.msra.mxu0 0.0
    %396 = vmatprep.subr.mxu0 0.0
    %397 = vmatpush1.msra.mxu0 0.0
    %398 = vmatprep.subr.mxu0 0.0
    %399 = vmatpush1.msra.mxu0 0.0
    %400 = vmatprep.subr.mxu0 0.0
    %401 = vmatpush1.msra.mxu0 0.0
    %402 = vmatprep.subr.mxu0 0.0
    %403 = vmatpush1.msra.mxu0 0.0
    %404 = vmatprep.subr.mxu0 0.0
    %405 = vmatpush1.msra.mxu0 0.0
    %406 = vmatprep.subr.mxu0 0.0
    %407 = vmatpush1.msra.mxu0 0.0
    %408 = vmatprep.subr.mxu0 0.0
    %409 = vmatpush1.msra.mxu0 0.0
    %410 = vmatprep.subr.mxu0 0.0
    %411 = vmatpush1.msra.mxu0 0.0
    %412 = vmatprep.mubr.f32.mxu0 0.0
    %413 = vmatmul.mubr.f32.gmra.mrb[0].mxu0 %v343
    %v414 = vpop.f32.mrb[0].mxu0
    %v415 = vadd.f32 0.0, %v414
    %v416 = vpop.f32.mrb[0].mxu0
    %417 = vmatprep.mubr.f32.mxu0 0.0
    %418 = vmatmul.mubr.f32.gmra.mrb[0].mxu0 %v346
    %v419 = vpop.f32.mrb[0].mxu0
    %v420 = vadd.f32 0.0, %v419
    %v421 = vpop.f32.mrb[0].mxu0
    %422 = vdwg.mxu0
    %v424 = vsel %vm341, %v335, 0
    %v427 = vsel %vm341, %v336, 0
    %429 = vmatprep.subr.mxu0 0.0
    %430 = vmatpush1.msra.mxu0 %v45
    %431 = vmatprep.subr.mxu0 0.0
    %432 = vmatpush1.msra.mxu0 %v46
    %433 = vmatprep.subr.mxu0 0.0
    %434 = vmatpush1.msra.mxu0 0.0
    %435 = vmatprep.subr.mxu0 0.0
    %436 = vmatpush1.msra.mxu0 0.0
    %437 = vmatprep.subr.mxu0 0.0
    %438 = vmatpush1.msra.mxu0 0.0
    %439 = vmatprep.subr.mxu0 0.0
    %440 = vmatpush1.msra.mxu0 0.0
    %441 = vmatprep.subr.mxu0 0.0
    %442 = vmatpush1.msra.mxu0 0.0
    %443 = vmatprep.subr.mxu0 0.0
    %444 = vmatpush1.msra.mxu0 0.0
    %445 = vmatprep.subr.mxu0 0.0
    %446 = vmatpush1.msra.mxu0 0.0
    %447 = vmatprep.subr.mxu0 0.0
    %448 = vmatpush1.msra.mxu0 0.0
    %449 = vmatprep.subr.mxu0 0.0
    %450 = vmatpush1.msra.mxu0 0.0
    %451 = vmatprep.subr.mxu0 0.0
    %452 = vmatpush1.msra.mxu0 0.0
    %453 = vmatprep.subr.mxu0 0.0
    %454 = vmatpush1.msra.mxu0 0.0
    %455 = vmatprep.subr.mxu0 0.0
    %456 = vmatpush1.msra.mxu0 0.0
    %457 = vmatprep.subr.mxu0 0.0
    %458 = vmatpush1.msra.mxu0 0.0
    %459 = vmatprep.subr.mxu0 0.0
    %460 = vmatpush1.msra.mxu0 0.0
    %461 = vmatprep.subr.mxu0 0.0
    %462 = vmatpush1.msra.mxu0 0.0
    %463 = vmatprep.subr.mxu0 0.0
    %464 = vmatpush1.msra.mxu0 0.0
    %465 = vmatprep.subr.mxu0 0.0
    %466 = vmatpush1.msra.mxu0 0.0
    %467 = vmatprep.subr.mxu0 0.0
    %468 = vmatpush1.msra.mxu0 0.0
    %469 = vmatprep.subr.mxu0 0.0
    %470 = vmatpush1.msra.mxu0 0.0
    %471 = vmatprep.subr.mxu0 0.0
    %472 = vmatpush1.msra.mxu0 0.0
    %473 = vmatprep.subr.mxu0 0.0
    %474 = vmatpush1.msra.mxu0 0.0
    %475 = vmatprep.subr.mxu0 0.0
    %476 = vmatpush1.msra.mxu0 0.0
    %477 = vmatprep.subr.mxu0 0.0
    %478 = vmatpush1.msra.mxu0 0.0
    %479 = vmatprep.subr.mxu0 0.0
    %480 = vmatpush1.msra.mxu0 0.0
    %481 = vmatprep.subr.mxu0 0.0
    %482 = vmatpush1.msra.mxu0 0.0
    %483 = vmatprep.subr.mxu0 0.0
    %484 = vmatpush1.msra.mxu0 0.0
    %485 = vmatprep.subr.mxu0 0.0
    %486 = vmatpush1.msra.mxu0 0.0
    %487 = vmatprep.subr.mxu0 0.0
    %488 = vmatpush1.msra.mxu0 0.0
    %489 = vmatprep.subr.mxu0 0.0
    %490 = vmatpush1.msra.mxu0 0.0
    %491 = vmatprep.subr.mxu0 0.0
    %492 = vmatpush1.msra.mxu0 0.0
    %493 = vmatprep.mubr.f32.mxu0 0.0
    %494 = vmatmul.mubr.f32.gmra.mrb[0].mxu0 %v424
    %v495 = vpop.f32.mrb[0].mxu0
    %v496 = vadd.f32 0.0, %v495
    %v497 = vpop.f32.mrb[0].mxu0
    %498 = vmatprep.mubr.f32.mxu0 0.0
    %499 = vmatmul.mubr.f32.gmra.mrb[0].mxu0 %v427
    %v500 = vpop.f32.mrb[0].mxu0
    %v501 = vadd.f32 0.0, %v500
    %v502 = vpop.f32.mrb[0].mxu0
    %503 = vdwg.mxu0
    %v505 = vsel %vm341, %v337, 0
    %v508 = vsel %vm341, %v338, 0
    %510 = vmatprep.subr.mxu0 0.0
    %511 = vmatpush1.msra.mxu0 %v43
    %512 = vmatprep.subr.mxu0 0.0
    %513 = vmatpush1.msra.mxu0 %v44
    %514 = vmatprep.subr.mxu0 0.0
    %515 = vmatpush1.msra.mxu0 0.0
    %516 = vmatprep.subr.mxu0 0.0
    %517 = vmatpush1.msra.mxu0 0.0
    %518 = vmatprep.subr.mxu0 0.0
    %519 = vmatpush1.msra.mxu0 0.0
    %520 = vmatprep.subr.mxu0 0.0
    %521 = vmatpush1.msra.mxu0 0.0
    %522 = vmatprep.subr.mxu0 0.0
    %523 = vmatpush1.msra.mxu0 0.0
    %524 = vmatprep.subr.mxu0 0.0
    %525 = vmatpush1.msra.mxu0 0.0
    %526 = vmatprep.subr.mxu0 0.0
    %527 = vmatpush1.msra.mxu0 0.0
    %528 = vmatprep.subr.mxu0 0.0
    %529 = vmatpush1.msra.mxu0 0.0
    %530 = vmatprep.subr.mxu0 0.0
    %531 = vmatpush1.msra.mxu0 0.0
    %532 = vmatprep.subr.mxu0 0.0
    %533 = vmatpush1.msra.mxu0 0.0
    %534 = vmatprep.subr.mxu0 0.0
    %535 = vmatpush1.msra.mxu0 0.0
    %536 = vmatprep.subr.mxu0 0.0
    %537 = vmatpush1.msra.mxu0 0.0
    %538 = vmatprep.subr.mxu0 0.0
    %539 = vmatpush1.msra.mxu0 0.0
    %540 = vmatprep.subr.mxu0 0.0
    %541 = vmatpush1.msra.mxu0 0.0
    %542 = vmatprep.subr.mxu0 0.0
    %543 = vmatpush1.msra.mxu0 0.0
    %544 = vmatprep.subr.mxu0 0.0
    %545 = vmatpush1.msra.mxu0 0.0
    %546 = vmatprep.subr.mxu0 0.0
    %547 = vmatpush1.msra.mxu0 0.0
    %548 = vmatprep.subr.mxu0 0.0
    %549 = vmatpush1.msra.mxu0 0.0
    %550 = vmatprep.subr.mxu0 0.0
    %551 = vmatpush1.msra.mxu0 0.0
    %552 = vmatprep.subr.mxu0 0.0
    %553 = vmatpush1.msra.mxu0 0.0
    %554 = vmatprep.subr.mxu0 0.0
    %555 = vmatpush1.msra.mxu0 0.0
    %556 = vmatprep.subr.mxu0 0.0
    %557 = vmatpush1.msra.mxu0 0.0
    %558 = vmatprep.subr.mxu0 0.0
    %559 = vmatpush1.msra.mxu0 0.0
    %560 = vmatprep.subr.mxu0 0.0
    %561 = vmatpush1.msra.mxu0 0.0
    %562 = vmatprep.subr.mxu0 0.0
    %563 = vmatpush1.msra.mxu0 0.0
    %564 = vmatprep.subr.mxu0 0.0
    %565 = vmatpush1.msra.mxu0 0.0
    %566 = vmatprep.subr.mxu0 0.0
    %567 = vmatpush1.msra.mxu0 0.0
    %568 = vmatprep.subr.mxu0 0.0
    %569 = vmatpush1.msra.mxu0 0.0
    %570 = vmatprep.subr.mxu0 0.0
    %571 = vmatpush1.msra.mxu0 0.0
    %572 = vmatprep.subr.mxu0 0.0
    %573 = vmatpush1.msra.mxu0 0.0
    %574 = vmatprep.mubr.f32.mxu0 0.0
    %575 = vmatmul.mubr.f32.gmra.mrb[0].mxu0 %v505
    %v576 = vpop.f32.mrb[0].mxu0
    %v577 = vadd.f32 0.0, %v576
    %v578 = vpop.f32.mrb[0].mxu0
    %579 = vmatprep.mubr.f32.mxu0 0.0
    %580 = vmatmul.mubr.f32.gmra.mrb[0].mxu0 %v508
    %v581 = vpop.f32.mrb[0].mxu0
    %v582 = vadd.f32 0.0, %v581
    %v583 = vpop.f32.mrb[0].mxu0
    %584 = vdwg.mxu0
    %v586 = vsel %vm341, %v339, 0
    %v589 = vsel %vm341, %v340, 0
    %591 = vmatprep.subr.mxu0 0.0
    %592 = vmatpush1.msra.mxu0 %v45
    %593 = vmatprep.subr.mxu0 0.0
    %594 = vmatpush1.msra.mxu0 %v46
    %595 = vmatprep.subr.mxu0 0.0
    %596 = vmatpush1.msra.mxu0 0.0
    %597 = vmatprep.subr.mxu0 0.0
    %598 = vmatpush1.msra.mxu0 0.0
    %599 = vmatprep.subr.mxu0 0.0
    %600 = vmatpush1.msra.mxu0 0.0
    %601 = vmatprep.subr.mxu0 0.0
    %602 = vmatpush1.msra.mxu0 0.0
    %603 = vmatprep.subr.mxu0 0.0
    %604 = vmatpush1.msra.mxu0 0.0
    %605 = vmatprep.subr.mxu0 0.0
    %606 = vmatpush1.msra.mxu0 0.0
    %607 = vmatprep.subr.mxu0 0.0
    %608 = vmatpush1.msra.mxu0 0.0
    %609 = vmatprep.subr.mxu0 0.0
    %610 = vmatpush1.msra.mxu0 0.0
    %611 = vmatprep.subr.mxu0 0.0
    %612 = vmatpush1.msra.mxu0 0.0
    %613 = vmatprep.subr.mxu0 0.0
    %614 = vmatpush1.msra.mxu0 0.0
    %615 = vmatprep.subr.mxu0 0.0
    %616 = vmatpush1.msra.mxu0 0.0
    %617 = vmatprep.subr.mxu0 0.0
    %618 = vmatpush1.msra.mxu0 0.0
    %619 = vmatprep.subr.mxu0 0.0
    %620 = vmatpush1.msra.mxu0 0.0
    %621 = vmatprep.subr.mxu0 0.0
    %622 = vmatpush1.msra.mxu0 0.0
    %623 = vmatprep.subr.mxu0 0.0
    %624 = vmatpush1.msra.mxu0 0.0
    %625 = vmatprep.subr.mxu0 0.0
    %626 = vmatpush1.msra.mxu0 0.0
    %627 = vmatprep.subr.mxu0 0.0
    %628 = vmatpush1.msra.mxu0 0.0
    %629 = vmatprep.subr.mxu0 0.0
    %630 = vmatpush1.msra.mxu0 0.0
    %631 = vmatprep.subr.mxu0 0.0
    %632 = vmatpush1.msra.mxu0 0.0
    %633 = vmatprep.subr.mxu0 0.0
    %634 = vmatpush1.msra.mxu0 0.0
    %635 = vmatprep.subr.mxu0 0.0
    %636 = vmatpush1.msra.mxu0 0.0
    %637 = vmatprep.subr.mxu0 0.0
    %638 = vmatpush1.msra.mxu0 0.0
    %639 = vmatprep.subr.mxu0 0.0
    %640 = vmatpush1.msra.mxu0 0.0
    %641 = vmatprep.subr.mxu0 0.0
    %642 = vmatpush1.msra.mxu0 0.0
    %643 = vmatprep.subr.mxu0 0.0
    %644 = vmatpush1.msra.mxu0 0.0
    %645 = vmatprep.subr.mxu0 0.0
    %646 = vmatpush1.msra.mxu0 0.0
    %647 = vmatprep.subr.mxu0 0.0
    %648 = vmatpush1.msra.mxu0 0.0
    %649 = vmatprep.subr.mxu0 0.0
    %650 = vmatpush1.msra.mxu0 0.0
    %651 = vmatprep.subr.mxu0 0.0
    %652 = vmatpush1.msra.mxu0 0.0
    %653 = vmatprep.subr.mxu0 0.0
    %654 = vmatpush1.msra.mxu0 0.0
    %655 = vmatprep.mubr.f32.mxu0 0.0
    %656 = vmatmul.mubr.f32.gmra.mrb[0].mxu0 %v586
    %v657 = vpop.f32.mrb[0].mxu0
    %v658 = vadd.f32 0.0, %v657
    %v659 = vpop.f32.mrb[0].mxu0
    %660 = vmatprep.mubr.f32.mxu0 0.0
    %661 = vmatmul.mubr.f32.gmra.mrb[0].mxu0 %v589
    %v662 = vpop.f32.mrb[0].mxu0
    %v663 = vadd.f32 0.0, %v662
    %v664 = vpop.f32.mrb[0].mxu0
    %665 = vdwg.mxu0
    %v666 = vpack.c.bf16 %v44, %v43
    %v667 = vpack.c.bf16 %v46, %v45
    %v668 = vpack.c.bf16 %v420, %v415
    %v669 = vpack.c.bf16 %v501, %v496
    %v670 = vpack.c.bf16 %v582, %v577
    %v671 = vpack.c.bf16 %v663, %v658
    %v672 = vld [vmem:[%s4] sm:$0xf]
    %v673 = vld [vmem:[%s4 + $0x4] sm:$0xf]
    %v674 = vld [vmem:[%s4 + $0x8] sm:$0xf]
    %v675 = vld [vmem:[%s4 + $0xc] sm:$0xf]
    %v676 = vld [vmem:[%s4 + $0x10] sm:$0xf]
    %v677 = vld [vmem:[%s4 + $0x14] sm:$0xf]
    %v678 = vld [vmem:[%s4 + $0x18] sm:$0xf]
    %v679 = vld [vmem:[%s4 + $0x1c] sm:$0xf]
    %v680 = vld [vmem:[%s4 + $0x20] sm:$0xf]
    %v681 = vld [vmem:[%s4 + $0x24] sm:$0xf]
    %v682 = vld [vmem:[%s4 + $0x28] sm:$0xf]
    %v683 = vld [vmem:[%s4 + $0x2c] sm:$0xf]
    %v684 = vld [vmem:[%s4 + $0x30] sm:$0xf]
    %v685 = vld [vmem:[%s4 + $0x34] sm:$0xf]
    %v686 = vld [vmem:[%s4 + $0x38] sm:$0xf]
    %v687 = vld [vmem:[%s4 + $0x3c] sm:$0xf]
    %v688 = vld [vmem:[%s5] sm:$0xf]
    %v689 = vld [vmem:[%s5 + $0x4] sm:$0xf]
    %v690 = vld [vmem:[%s5 + $0x8] sm:$0xf]
    %v691 = vld [vmem:[%s5 + $0xc] sm:$0xf]
    %v692 = vld [vmem:[%s5 + $0x10] sm:$0xf]
    %v693 = vld [vmem:[%s5 + $0x14] sm:$0xf]
    %v694 = vld [vmem:[%s5 + $0x18] sm:$0xf]
    %v695 = vld [vmem:[%s5 + $0x1c] sm:$0xf]
    %v696 = vld [vmem:[%s5 + $0x20] sm:$0xf]
    %v697 = vld [vmem:[%s5 + $0x24] sm:$0xf]
    %v698 = vld [vmem:[%s5 + $0x28] sm:$0xf]
    %v699 = vld [vmem:[%s5 + $0x2c] sm:$0xf]
    %v700 = vld [vmem:[%s5 + $0x30] sm:$0xf]
    %v701 = vld [vmem:[%s5 + $0x34] sm:$0xf]
    %v702 = vld [vmem:[%s5 + $0x38] sm:$0xf]
    %v703 = vld [vmem:[%s5 + $0x3c] sm:$0xf]
    %v720 = vunpack.c.l.b16 %v688
    %v721 = vunpack.c.l.b16 %v689
    %v722 = vunpack.c.l.b16 %v690
    %v723 = vunpack.c.l.b16 %v691
    %v724 = vunpack.c.l.b16 %v692
    %v725 = vunpack.c.l.b16 %v693
    %v726 = vunpack.c.l.b16 %v694
    %v727 = vunpack.c.l.b16 %v695
    %v728 = vunpack.c.l.b16 %v696
    %v729 = vunpack.c.l.b16 %v697
    %v730 = vunpack.c.l.b16 %v698
    %v731 = vunpack.c.l.b16 %v699
    %v732 = vunpack.c.l.b16 %v700
    %v733 = vunpack.c.l.b16 %v701
    %v734 = vunpack.c.l.b16 %v702
    %v735 = vunpack.c.l.b16 %v703
    %v736 = vpack.c.b16 %v721, %v720
    %v737 = vpack.c.b16 %v723, %v722
    %v738 = vpack.c.b16 %v725, %v724
    %v739 = vpack.c.b16 %v727, %v726
    %v740 = vpack.c.b16 %v729, %v728
    %v741 = vpack.c.b16 %v731, %v730
    %v742 = vpack.c.b16 %v733, %v732
    %v743 = vpack.c.b16 %v735, %v734
    %752 = vmatprep.subr.bf16.mxu0 0
    %753 = vmatpush1.bf16.msra.mxu0 %v736
    %754 = vmatprep.subr.bf16.mxu0 0
    %755 = vmatpush1.bf16.msra.mxu0 %v737
    %756 = vmatprep.subr.bf16.mxu0 0
    %757 = vmatpush1.bf16.msra.mxu0 %v738
    %758 = vmatprep.subr.bf16.mxu0 0
    %759 = vmatpush1.bf16.msra.mxu0 %v739
    %760 = vmatprep.subr.bf16.mxu0 0
    %761 = vmatpush1.bf16.msra.mxu0 %v740
    %762 = vmatprep.subr.bf16.mxu0 0
    %763 = vmatpush1.bf16.msra.mxu0 %v741
    %764 = vmatprep.subr.bf16.mxu0 0
    %765 = vmatpush1.bf16.msra.mxu0 %v742
    %766 = vmatprep.subr.bf16.mxu0 0
    %767 = vmatpush1.bf16.msra.mxu0 %v743
    %768 = vmatprep.subr.bf16.mxu0 0
    %769 = vmatpush1.bf16.msra.mxu0 0
    %770 = vmatprep.subr.bf16.mxu0 0
    %771 = vmatpush1.bf16.msra.mxu0 0
    %772 = vmatprep.subr.bf16.mxu0 0
    %773 = vmatpush1.bf16.msra.mxu0 0
    %774 = vmatprep.subr.bf16.mxu0 0
    %775 = vmatpush1.bf16.msra.mxu0 0
    %776 = vmatprep.subr.bf16.mxu0 0
    %777 = vmatpush1.bf16.msra.mxu0 0
    %778 = vmatprep.subr.bf16.mxu0 0
    %779 = vmatpush1.bf16.msra.mxu0 0
    %780 = vmatprep.subr.bf16.mxu0 0
    %781 = vmatpush1.bf16.msra.mxu0 0
    %782 = vmatprep.subr.bf16.mxu0 0
    %783 = vmatpush1.bf16.msra.mxu0 0
    %784 = vmatprep.mubr.bf16.mxu0 0
    %785 = vmatmul.mubr.bf16.gmra.mrb[0].mxu0 %v668
    %v786 = vpop.f32.mrb[0].mxu0
    %v787 = vadd.f32 0.0, %v786
    %v788 = vpop.f32.mrb[0].mxu0
    %v789 = vpop.f32.mrb[0].mxu0
    %v790 = vadd.f32 0.0, %v789
    %v791 = vpop.f32.mrb[0].mxu0
    %792 = vmatprep.mubr.bf16.mxu0 0
    %793 = vmatmul.mubr.bf16.gmra.mrb[0].mxu0 %v669
    %v794 = vpop.f32.mrb[0].mxu0
    %v795 = vadd.f32 0.0, %v794
    %v796 = vpop.f32.mrb[0].mxu0
    %v797 = vpop.f32.mrb[0].mxu0
    %v798 = vadd.f32 0.0, %v797
    %v799 = vpop.f32.mrb[0].mxu0
    %800 = vdwg.mxu0
    %v817 = vunpack.c.l.b16 %v672
    %v818 = vunpack.c.l.b16 %v673
    %v819 = vunpack.c.l.b16 %v674
    %v820 = vunpack.c.l.b16 %v675
    %v821 = vunpack.c.l.b16 %v676
    %v822 = vunpack.c.l.b16 %v677
    %v823 = vunpack.c.l.b16 %v678
    %v824 = vunpack.c.l.b16 %v679
    %v825 = vunpack.c.l.b16 %v680
    %v826 = vunpack.c.l.b16 %v681
    %v827 = vunpack.c.l.b16 %v682
    %v828 = vunpack.c.l.b16 %v683
    %v829 = vunpack.c.l.b16 %v684
    %v830 = vunpack.c.l.b16 %v685
    %v831 = vunpack.c.l.b16 %v686
    %v832 = vunpack.c.l.b16 %v687
    %v833 = vpack.c.b16 %v818, %v817
    %v834 = vpack.c.b16 %v820, %v819
    %v835 = vpack.c.b16 %v822, %v821
    %v836 = vpack.c.b16 %v824, %v823
    %v837 = vpack.c.b16 %v826, %v825
    %v838 = vpack.c.b16 %v828, %v827
    %v839 = vpack.c.b16 %v830, %v829
    %v840 = vpack.c.b16 %v832, %v831
    %849 = vmatprep.subr.bf16.mxu0 0
    %850 = vmatpush1.bf16.msra.mxu0 %v833
    %851 = vmatprep.subr.bf16.mxu0 0
    %852 = vmatpush1.bf16.msra.mxu0 %v834
    %853 = vmatprep.subr.bf16.mxu0 0
    %854 = vmatpush1.bf16.msra.mxu0 %v835
    %855 = vmatprep.subr.bf16.mxu0 0
    %856 = vmatpush1.bf16.msra.mxu0 %v836
    %857 = vmatprep.subr.bf16.mxu0 0
    %858 = vmatpush1.bf16.msra.mxu0 %v837
    %859 = vmatprep.subr.bf16.mxu0 0
    %860 = vmatpush1.bf16.msra.mxu0 %v838
    %861 = vmatprep.subr.bf16.mxu0 0
    %862 = vmatpush1.bf16.msra.mxu0 %v839
    %863 = vmatprep.subr.bf16.mxu0 0
    %864 = vmatpush1.bf16.msra.mxu0 %v840
    %865 = vmatprep.subr.bf16.mxu0 0
    %866 = vmatpush1.bf16.msra.mxu0 0
    %867 = vmatprep.subr.bf16.mxu0 0
    %868 = vmatpush1.bf16.msra.mxu0 0
    %869 = vmatprep.subr.bf16.mxu0 0
    %870 = vmatpush1.bf16.msra.mxu0 0
    %871 = vmatprep.subr.bf16.mxu0 0
    %872 = vmatpush1.bf16.msra.mxu0 0
    %873 = vmatprep.subr.bf16.mxu0 0
    %874 = vmatpush1.bf16.msra.mxu0 0
    %875 = vmatprep.subr.bf16.mxu0 0
    %876 = vmatpush1.bf16.msra.mxu0 0
    %877 = vmatprep.subr.bf16.mxu0 0
    %878 = vmatpush1.bf16.msra.mxu0 0
    %879 = vmatprep.subr.bf16.mxu0 0
    %880 = vmatpush1.bf16.msra.mxu0 0
    %881 = vmatprep.mubr.bf16.mxu0 0
    %882 = vmatmul.mubr.bf16.gmra.mrb[0].mxu0 %v666
    %v883 = vpop.f32.mrb[0].mxu0
    %v884 = vadd.f32 %v787, %v883
    %v885 = vpop.f32.mrb[0].mxu0
    %v886 = vpop.f32.mrb[0].mxu0
    %v887 = vadd.f32 %v790, %v886
    %v888 = vpop.f32.mrb[0].mxu0
    %889 = vmatprep.mubr.bf16.mxu0 0
    %890 = vmatmul.mubr.bf16.gmra.mrb[0].mxu0 %v667
    %v891 = vpop.f32.mrb[0].mxu0
    %v892 = vadd.f32 %v795, %v891
    %v893 = vpop.f32.mrb[0].mxu0
    %v894 = vpop.f32.mrb[0].mxu0
    %v895 = vadd.f32 %v798, %v894
    %v896 = vpop.f32.mrb[0].mxu0
    %897 = vdwg.mxu0
    %v898 = vld [vmem:[%s6] sm:$0xf]
    %v899 = vld [vmem:[%s6 + $0x4] sm:$0xf]
    %v900 = vld [vmem:[%s6 + $0x8] sm:$0xf]
    %v901 = vld [vmem:[%s6 + $0xc] sm:$0xf]
    %v902 = vld [vmem:[%s6 + $0x10] sm:$0xf]
    %v903 = vld [vmem:[%s6 + $0x14] sm:$0xf]
    %v904 = vld [vmem:[%s6 + $0x18] sm:$0xf]
    %v905 = vld [vmem:[%s6 + $0x1c] sm:$0xf]
    %v906 = vld [vmem:[%s6 + $0x20] sm:$0xf]
    %v907 = vld [vmem:[%s6 + $0x24] sm:$0xf]
    %v908 = vld [vmem:[%s6 + $0x28] sm:$0xf]
    %v909 = vld [vmem:[%s6 + $0x2c] sm:$0xf]
    %v910 = vld [vmem:[%s6 + $0x30] sm:$0xf]
    %v911 = vld [vmem:[%s6 + $0x34] sm:$0xf]
    %v912 = vld [vmem:[%s6 + $0x38] sm:$0xf]
    %v913 = vld [vmem:[%s6 + $0x3c] sm:$0xf]
    %v930 = vunpack.c.l.b16 %v898
    %v931 = vunpack.c.l.b16 %v899
    %v932 = vunpack.c.l.b16 %v900
    %v933 = vunpack.c.l.b16 %v901
    %v934 = vunpack.c.l.b16 %v902
    %v935 = vunpack.c.l.b16 %v903
    %v936 = vunpack.c.l.b16 %v904
    %v937 = vunpack.c.l.b16 %v905
    %v938 = vunpack.c.l.b16 %v906
    %v939 = vunpack.c.l.b16 %v907
    %v940 = vunpack.c.l.b16 %v908
    %v941 = vunpack.c.l.b16 %v909
    %v942 = vunpack.c.l.b16 %v910
    %v943 = vunpack.c.l.b16 %v911
    %v944 = vunpack.c.l.b16 %v912
    %v945 = vunpack.c.l.b16 %v913
    %v946 = vpack.c.b16 %v931, %v930
    %v947 = vpack.c.b16 %v933, %v932
    %v948 = vpack.c.b16 %v935, %v934
    %v949 = vpack.c.b16 %v937, %v936
    %v950 = vpack.c.b16 %v939, %v938
    %v951 = vpack.c.b16 %v941, %v940
    %v952 = vpack.c.b16 %v943, %v942
    %v953 = vpack.c.b16 %v945, %v944
    %962 = vmatprep.subr.bf16.mxu0 0
    %963 = vmatpush1.bf16.msra.mxu0 %v946
    %964 = vmatprep.subr.bf16.mxu0 0
    %965 = vmatpush1.bf16.msra.mxu0 %v947
    %966 = vmatprep.subr.bf16.mxu0 0
    %967 = vmatpush1.bf16.msra.mxu0 %v948
    %968 = vmatprep.subr.bf16.mxu0 0
    %969 = vmatpush1.bf16.msra.mxu0 %v949
    %970 = vmatprep.subr.bf16.mxu0 0
    %971 = vmatpush1.bf16.msra.mxu0 %v950
    %972 = vmatprep.subr.bf16.mxu0 0
    %973 = vmatpush1.bf16.msra.mxu0 %v951
    %974 = vmatprep.subr.bf16.mxu0 0
    %975 = vmatpush1.bf16.msra.mxu0 %v952
    %976 = vmatprep.subr.bf16.mxu0 0
    %977 = vmatpush1.bf16.msra.mxu0 %v953
    %978 = vmatprep.subr.bf16.mxu0 0
    %979 = vmatpush1.bf16.msra.mxu0 0
    %980 = vmatprep.subr.bf16.mxu0 0
    %981 = vmatpush1.bf16.msra.mxu0 0
    %982 = vmatprep.subr.bf16.mxu0 0
    %983 = vmatpush1.bf16.msra.mxu0 0
    %984 = vmatprep.subr.bf16.mxu0 0
    %985 = vmatpush1.bf16.msra.mxu0 0
    %986 = vmatprep.subr.bf16.mxu0 0
    %987 = vmatpush1.bf16.msra.mxu0 0
    %988 = vmatprep.subr.bf16.mxu0 0
    %989 = vmatpush1.bf16.msra.mxu0 0
    %990 = vmatprep.subr.bf16.mxu0 0
    %991 = vmatpush1.bf16.msra.mxu0 0
    %992 = vmatprep.subr.bf16.mxu0 0
    %993 = vmatpush1.bf16.msra.mxu0 0
    %994 = vmatprep.mubr.bf16.mxu0 0
    %995 = vmatmul.mubr.bf16.gmra.mrb[0].mxu0 %v670
    %v996 = vpop.f32.mrb[0].mxu0
    %v997 = vadd.f32 0.0, %v996
    %v998 = vpop.f32.mrb[0].mxu0
    %v999 = vpop.f32.mrb[0].mxu0
    %v1000 = vadd.f32 0.0, %v999
    %v1001 = vpop.f32.mrb[0].mxu0
    %1002 = vmatprep.mubr.bf16.mxu0 0
    %1003 = vmatmul.mubr.bf16.gmra.mrb[0].mxu0 %v671
    %v1004 = vpop.f32.mrb[0].mxu0
    %v1005 = vadd.f32 0.0, %v1004
    %v1006 = vpop.f32.mrb[0].mxu0
    %v1007 = vpop.f32.mrb[0].mxu0
    %v1008 = vadd.f32 0.0, %v1007
    %v1009 = vpop.f32.mrb[0].mxu0
    %1010 = vdwg.mxu0
    %v1011 = vadd.f32 %v884, %v997
    %v1012 = vadd.f32 %v887, %v1000
    %v1013 = vadd.f32 %v892, %v1005
    %v1014 = vadd.f32 %v895, %v1008
    %v1015 = vld [vmem:[%s7] sm:$0x1]
    %v1017 = vlaneseq
    %v1018 = vshrl.u32 %v1017, 7
    %v1019 = vsub.s32 0, %v1018
    %v1020 = vrot.slane %v1015, %v1019
    %v1022 = vadd.f32 %v1011, %v1020
    %v1023 = vadd.f32 %v1012, %v1020
    %v1024 = vadd.f32 %v1013, %v1020
    %v1025 = vadd.f32 %v1014, %v1020
    %v1026 = vtanh.pop %v1022
    %v1027 = vtanh.pop %v1023
    %v1028 = vtanh.pop %v1024
    %v1029 = vtanh.pop %v1025
    %v1030 = vld [vmem:[%s2] sm:$0x3]
    %v1031 = vlaneseq
    %v1032 = vshrl.u32 %v1031, 7
    %v1033 = vsub.s32 0, %v1032
    %v1034 = vrot.slane %v1030, %v1033
    %1036 = vbcast.lane.b32.xlu0 %v1034, 256
    %v1037 = vpop.permute.xlu0 %1036
    %s1039 = sor.u32 256, 8
    %1040 = vbcast.lane.b32.xlu0 %v1034, %s1039
    %v1041 = vpop.permute.xlu0 %1040
    %v1042 = vlaneseq
    %v1043 = vshrl.u32 %v1042, 7
    %v1044 = vsub.s32 1, %v1043
    %v1045 = vrot.slane %v1030, %v1044
    %1047 = vbcast.lane.b32.xlu0 %v1045, 256
    %v1048 = vpop.permute.xlu0 %1047
    %s1050 = sor.u32 256, 8
    %1051 = vbcast.lane.b32.xlu0 %v1045, %s1050
    %v1052 = vpop.permute.xlu0 %1051
    %vm1053 = vcmp.gt.f32.partialorder %v1037, 0.0
    %vm1054 = vcmp.gt.f32.partialorder %v1041, 0.0
    %vm1055 = vcmp.gt.f32.partialorder %v1048, 0.0
    %vm1056 = vcmp.gt.f32.partialorder %v1052, 0.0
    %v1057 = vsel %vm1053, 1, 0
    %v1058 = vsel %vm1054, 1, 0
    %v1059 = vsel %vm1055, 1, 0
    %v1060 = vsel %vm1056, 1, 0
    %vm1061 = vcmp.eq.s32.totalorder %v1057, 1
    %vm1062 = vcmp.eq.s32.totalorder %v1058, 1
    %vm1063 = vcmp.eq.s32.totalorder %v1059, 1
    %vm1064 = vcmp.eq.s32.totalorder %v1060, 1
    %v1065 = vsel %vm1061, %v1026, -2.0
    %v1066 = vsel %vm1062, %v1027, -2.0
    %v1067 = vsel %vm1063, %v1028, -2.0
    %v1068 = vsel %vm1064, %v1029, -2.0
    %v1069 = vmax.f32 %v1065, %v1066
    %v1070 = vrot.slane %v1069, 4
    %v1071 = vmax.f32 %v1069, %v1070
    %v1072 = vrot.slane %v1071, 2
    %v1073 = vmax.f32 %v1071, %v1072
    %v1074 = vrot.slane %v1073, 1
    %v1075 = vmax.f32 %v1073, %v1074
    %v1076 = vmax.f32 %v1067, %v1068
    %v1077 = vrot.slane %v1076, 4
    %v1078 = vmax.f32 %v1076, %v1077
    %v1079 = vrot.slane %v1078, 2
    %v1080 = vmax.f32 %v1078, %v1079
    %v1081 = vrot.slane %v1080, 1
    %v1082 = vmax.f32 %v1080, %v1081
    %v1083 = vpack.c.bf16 %v1075, %v1075
    %v1084 = vpack.c.bf16 %v1082, %v1082
    %v1085 = vld [vmem:[%s8] sm:$0xf]
    %v1086 = vld [vmem:[%s8 + $0x4] sm:$0xf]
    %v1087 = vld [vmem:[%s8 + $0x8] sm:$0xf]
    %v1088 = vld [vmem:[%s8 + $0xc] sm:$0xf]
    %v1089 = vld [vmem:[%s8 + $0x10] sm:$0xf]
    %v1090 = vld [vmem:[%s8 + $0x14] sm:$0xf]
    %v1091 = vld [vmem:[%s8 + $0x18] sm:$0xf]
    %v1092 = vld [vmem:[%s8 + $0x1c] sm:$0xf]
    %v1093 = vld [vmem:[%s8 + $0x20] sm:$0xf]
    %v1094 = vld [vmem:[%s8 + $0x24] sm:$0xf]
    %v1095 = vld [vmem:[%s8 + $0x28] sm:$0xf]
    %v1096 = vld [vmem:[%s8 + $0x2c] sm:$0xf]
    %v1097 = vld [vmem:[%s8 + $0x30] sm:$0xf]
    %v1098 = vld [vmem:[%s8 + $0x34] sm:$0xf]
    %v1099 = vld [vmem:[%s8 + $0x38] sm:$0xf]
    %v1100 = vld [vmem:[%s8 + $0x3c] sm:$0xf]
    %v1101 = vld [vmem:[%s9] sm:$0x1]
    %v1103 = vlaneseq
    %v1104 = vshrl.u32 %v1103, 7
    %v1105 = vsub.s32 0, %v1104
    %v1106 = vrot.slane %v1101, %v1105
    %v1110 = vunpack.c.l.b16 %v1083
    %v1111 = vunpack.c.l.b16 %v1084
    %vm1112 = vcmask 1041409
    %v1113 = vsel %vm1112, %v1111, %v1110
    %v1114 = vpack.c.b16 %v1113, %v1113
    %v1132 = vunpack.c.l.b16 %v1085
    %v1133 = vunpack.c.l.b16 %v1086
    %v1134 = vunpack.c.l.b16 %v1087
    %v1135 = vunpack.c.l.b16 %v1088
    %v1136 = vunpack.c.l.b16 %v1089
    %v1137 = vunpack.c.l.b16 %v1090
    %v1138 = vunpack.c.l.b16 %v1091
    %v1139 = vunpack.c.l.b16 %v1092
    %v1140 = vunpack.c.l.b16 %v1093
    %v1141 = vunpack.c.l.b16 %v1094
    %v1142 = vunpack.c.l.b16 %v1095
    %v1143 = vunpack.c.l.b16 %v1096
    %v1144 = vunpack.c.l.b16 %v1097
    %v1145 = vunpack.c.l.b16 %v1098
    %v1146 = vunpack.c.l.b16 %v1099
    %v1147 = vunpack.c.l.b16 %v1100
    %v1148 = vpack.c.b16 %v1133, %v1132
    %v1149 = vpack.c.b16 %v1135, %v1134
    %v1150 = vpack.c.b16 %v1137, %v1136
    %v1151 = vpack.c.b16 %v1139, %v1138
    %v1152 = vpack.c.b16 %v1141, %v1140
    %v1153 = vpack.c.b16 %v1143, %v1142
    %v1154 = vpack.c.b16 %v1145, %v1144
    %v1155 = vpack.c.b16 %v1147, %v1146
    %1164 = vmatprep.subr.bf16.mxu0 0
    %1165 = vmatpush1.bf16.msra.mxu0 %v1148
    %1166 = vmatprep.subr.bf16.mxu0 0
    %1167 = vmatpush1.bf16.msra.mxu0 %v1149
    %1168 = vmatprep.subr.bf16.mxu0 0
    %1169 = vmatpush1.bf16.msra.mxu0 %v1150
    %1170 = vmatprep.subr.bf16.mxu0 0
    %1171 = vmatpush1.bf16.msra.mxu0 %v1151
    %1172 = vmatprep.subr.bf16.mxu0 0
    %1173 = vmatpush1.bf16.msra.mxu0 %v1152
    %1174 = vmatprep.subr.bf16.mxu0 0
    %1175 = vmatpush1.bf16.msra.mxu0 %v1153
    %1176 = vmatprep.subr.bf16.mxu0 0
    %1177 = vmatpush1.bf16.msra.mxu0 %v1154
    %1178 = vmatprep.subr.bf16.mxu0 0
    %1179 = vmatpush1.bf16.msra.mxu0 %v1155
    %1180 = vmatprep.subr.bf16.mxu0 0
    %1181 = vmatpush1.bf16.msra.mxu0 0
    %1182 = vmatprep.subr.bf16.mxu0 0
    %1183 = vmatpush1.bf16.msra.mxu0 0
    %1184 = vmatprep.subr.bf16.mxu0 0
    %1185 = vmatpush1.bf16.msra.mxu0 0
    %1186 = vmatprep.subr.bf16.mxu0 0
    %1187 = vmatpush1.bf16.msra.mxu0 0
    %1188 = vmatprep.subr.bf16.mxu0 0
    %1189 = vmatpush1.bf16.msra.mxu0 0
    %1190 = vmatprep.subr.bf16.mxu0 0
    %1191 = vmatpush1.bf16.msra.mxu0 0
    %1192 = vmatprep.subr.bf16.mxu0 0
    %1193 = vmatpush1.bf16.msra.mxu0 0
    %1194 = vmatprep.subr.bf16.mxu0 0
    %1195 = vmatpush1.bf16.msra.mxu0 0
    %1196 = vmatprep.mubr.bf16.mxu0 0
    %1197 = vmatmul.mubr.bf16.gmra.mrb[0].mxu0 %v1114
    %v1198 = vpop.f32.mrb[0].mxu0
    %v1199 = vadd.f32 %v1106, %v1198
    %v1200 = vpop.f32.mrb[0].mxu0
    %v1201 = vpop.f32.mrb[0].mxu0
    %v1202 = vpop.f32.mrb[0].mxu0
    %1203 = vdwg.mxu0
    %v1204 = vtanh.pop %v1199
    %1205 = vst [vmem:[#allocation2] sm:$0x3] %v1204
    %v1206 = vld [vmem:[%s3] sm:$0xff]
    %v1207 = vld [vmem:[%s3 + $0x8] sm:$0xff]
    %v1208 = vld [vmem:[%s3 + $0x10] sm:$0xff]
    %v1209 = vld [vmem:[%s3 + $0x18] sm:$0xff]
    %v1210 = vadd.f32 %v1206, %v1207
    %v1211 = vrot.slane %v1210, 4
    %v1212 = vadd.f32 %v1210, %v1211
    %v1213 = vrot.slane %v1212, 2
    %v1214 = vadd.f32 %v1212, %v1213
    %v1215 = vrot.slane %v1214, 1
    %v1216 = vadd.f32 %v1214, %v1215
    %v1217 = vadd.f32 %v1208, %v1209
    %v1218 = vrot.slane %v1217, 4
    %v1219 = vadd.f32 %v1217, %v1218
    %v1220 = vrot.slane %v1219, 2
    %v1221 = vadd.f32 %v1219, %v1220
    %v1222 = vrot.slane %v1221, 1
    %v1223 = vadd.f32 %v1221, %v1222
    %v1224 = vmul.f32 %v1216, 0.083333336
    %v1225 = vmul.f32 %v1223, 0.083333336
    %v1226 = vpack.c.bf16 %v1224, %v1224
    %v1227 = vpack.c.bf16 %v1225, %v1225
    %v1228 = vld [vmem:[%s10] sm:$0xf]
    %v1229 = vld [vmem:[%s10 + $0x4] sm:$0xf]
    %v1230 = vld [vmem:[%s10 + $0x8] sm:$0xf]
    %v1231 = vld [vmem:[%s10 + $0xc] sm:$0xf]
    %v1232 = vld [vmem:[%s10 + $0x10] sm:$0xf]
    %v1233 = vld [vmem:[%s10 + $0x14] sm:$0xf]
    %v1234 = vld [vmem:[%s10 + $0x18] sm:$0xf]
    %v1235 = vld [vmem:[%s10 + $0x1c] sm:$0xf]
    %v1236 = vld [vmem:[%s10 + $0x20] sm:$0xf]
    %v1237 = vld [vmem:[%s10 + $0x24] sm:$0xf]
    %v1238 = vld [vmem:[%s10 + $0x28] sm:$0xf]
    %v1239 = vld [vmem:[%s10 + $0x2c] sm:$0xf]
    %v1240 = vld [vmem:[%s10 + $0x30] sm:$0xf]
    %v1241 = vld [vmem:[%s10 + $0x34] sm:$0xf]
    %v1242 = vld [vmem:[%s10 + $0x38] sm:$0xf]
    %v1243 = vld [vmem:[%s10 + $0x3c] sm:$0xf]
    %v1246 = vunpack.c.l.b16 %v1226
    %v1247 = vunpack.c.l.b16 %v1227
    %v1248 = vsel %vm1112, %v1247, %v1246
    %v1249 = vpack.c.b16 %v1248, %v1248
    %v1267 = vunpack.c.l.b16 %v1228
    %v1268 = vunpack.c.l.b16 %v1229
    %v1269 = vunpack.c.l.b16 %v1230
    %v1270 = vunpack.c.l.b16 %v1231
    %v1271 = vunpack.c.l.b16 %v1232
    %v1272 = vunpack.c.l.b16 %v1233
    %v1273 = vunpack.c.l.b16 %v1234
    %v1274 = vunpack.c.l.b16 %v1235
    %v1275 = vunpack.c.l.b16 %v1236
    %v1276 = vunpack.c.l.b16 %v1237
    %v1277 = vunpack.c.l.b16 %v1238
    %v1278 = vunpack.c.l.b16 %v1239
    %v1279 = vunpack.c.l.b16 %v1240
    %v1280 = vunpack.c.l.b16 %v1241
    %v1281 = vunpack.c.l.b16 %v1242
    %v1282 = vunpack.c.l.b16 %v1243
    %v1283 = vpack.c.b16 %v1268, %v1267
    %v1284 = vpack.c.b16 %v1270, %v1269
    %v1285 = vpack.c.b16 %v1272, %v1271
    %v1286 = vpack.c.b16 %v1274, %v1273
    %v1287 = vpack.c.b16 %v1276, %v1275
    %v1288 = vpack.c.b16 %v1278, %v1277
    %v1289 = vpack.c.b16 %v1280, %v1279
    %v1290 = vpack.c.b16 %v1282, %v1281
    %1299 = vmatprep.subr.bf16.mxu0 0
    %1300 = vmatpush1.bf16.msra.mxu0 %v1283
    %1301 = vmatprep.subr.bf16.mxu0 0
    %1302 = vmatpush1.bf16.msra.mxu0 %v1284
    %1303 = vmatprep.subr.bf16.mxu0 0
    %1304 = vmatpush1.bf16.msra.mxu0 %v1285
    %1305 = vmatprep.subr.bf16.mxu0 0
    %1306 = vmatpush1.bf16.msra.mxu0 %v1286
    %1307 = vmatprep.subr.bf16.mxu0 0
    %1308 = vmatpush1.bf16.msra.mxu0 %v1287
    %1309 = vmatprep.subr.bf16.mxu0 0
    %1310 = vmatpush1.bf16.msra.mxu0 %v1288
    %1311 = vmatprep.subr.bf16.mxu0 0
    %1312 = vmatpush1.bf16.msra.mxu0 %v1289
    %1313 = vmatprep.subr.bf16.mxu0 0
    %1314 = vmatpush1.bf16.msra.mxu0 %v1290
    %1315 = vmatprep.subr.bf16.mxu0 0
    %1316 = vmatpush1.bf16.msra.mxu0 0
    %1317 = vmatprep.subr.bf16.mxu0 0
    %1318 = vmatpush1.bf16.msra.mxu0 0
    %1319 = vmatprep.subr.bf16.mxu0 0
    %1320 = vmatpush1.bf16.msra.mxu0 0
    %1321 = vmatprep.subr.bf16.mxu0 0
    %1322 = vmatpush1.bf16.msra.mxu0 0
    %1323 = vmatprep.subr.bf16.mxu0 0
    %1324 = vmatpush1.bf16.msra.mxu0 0
    %1325 = vmatprep.subr.bf16.mxu0 0
    %1326 = vmatpush1.bf16.msra.mxu0 0
    %1327 = vmatprep.subr.bf16.mxu0 0
    %1328 = vmatpush1.bf16.msra.mxu0 0
    %1329 = vmatprep.subr.bf16.mxu0 0
    %1330 = vmatpush1.bf16.msra.mxu0 0
    %1331 = vmatprep.mubr.bf16.mxu0 0
    %1332 = vmatmul.mubr.bf16.gmra.mrb[0].mxu0 %v1249
    %v1333 = vpop.f32.mrb[0].mxu0
    %v1334 = vadd.f32 0.0, %v1333
    %v1335 = vpop.f32.mrb[0].mxu0
    %v1336 = vpop.f32.mrb[0].mxu0
    %v1337 = vpop.f32.mrb[0].mxu0
    %1338 = vdwg.mxu0
    %v1341 = vunpack.c.l.s4 1966171168
    %v1342 = vunpack.c.0.s8 %v1341
    %v1343 = vlaneseq
    %v1344 = vshrl.u32 %v1343, 7
    %v1345 = vsub.s32 %v1342, %v1344
    %v1346 = vrot.slane %v1334, %v1345
    %v1347 = vcombine.high %v1346, %v1346
    %v1349 = vunpack.c.l.s4 1966171168
    %v1350 = vunpack.c.0.s8 %v1349
    %v1351 = vlaneseq
    %v1352 = vshrl.u32 %v1351, 7
    %v1353 = vsub.s32 %v1350, %v1352
    %v1354 = vrot.slane %v1346, %v1353
    %v1356 = vunpack.c.l.s4 1966171168
    %v1357 = vunpack.c.0.s8 %v1356
    %v1358 = vlaneseq
    %v1359 = vshrl.u32 %v1358, 7
    %v1360 = vsub.s32 %v1357, %v1359
    %v1361 = vrot.slane %v1347, %v1360
    %v1362 = vlaneseq
    %v1363 = vshrl.u32 %v1362, 7
    %v1364 = vsub.s32 0, %v1363
    %v1365 = vrot.slane %v1354, %v1364
    %v1366 = vlaneseq
    %v1367 = vshrl.u32 %v1366, 7
    %v1368 = vsub.s32 0, %v1367
    %v1369 = vrot.slane %v1361, %v1368
    %v1372 = vmul.f32 %v1206, %v1365
    %v1373 = vmul.f32 %v1207, %v1365
    %v1374 = vmul.f32 %v1208, %v1369
    %v1375 = vmul.f32 %v1209, %v1369
    %1376 = vadd.xlane.f32.xlu0 %v1372
    %v1377 = vpop.xlane.xlu0 %1376
    %1378 = vadd.xlane.f32.xlu0 %v1373
    %v1379 = vpop.xlane.xlu0 %1378
    %1380 = vadd.xlane.f32.xlu0 %v1374
    %v1381 = vpop.xlane.xlu0 %1380
    %1382 = vadd.xlane.f32.xlu0 %v1375
    %v1383 = vpop.xlane.xlu0 %1382
    %vm1384 = vcmp.lt.s32.totalorder %v77, 12
    %v1389 = vlaneseq
    %v1390 = vshrl.u32 %v1389, 7
    %v1391 = vsub.s32 %v77, %v1390
    %v1392 = vrot.slane %v1377, %v1391
    %v1393 = vadd.s32 %v77, 4294967288
    %v1394 = vlaneseq
    %v1395 = vshrl.u32 %v1394, 7
    %v1396 = vsub.s32 %v1393, %v1395
    %v1397 = vrot.slane %v1379, %v1396
    %vm1398 = vcmask 130112
    %v1399 = vsel %vm1398, %v1397, %v1392
    %v1400 = vlaneseq
    %v1401 = vshrl.u32 %v1400, 7
    %v1402 = vsub.s32 %v77, %v1401
    %v1403 = vrot.slane %v1381, %v1402
    %v1404 = vlaneseq
    %v1405 = vshrl.u32 %v1404, 7
    %v1406 = vsub.s32 %v1393, %v1405
    %v1407 = vrot.slane %v1383, %v1406
    %v1408 = vsel %vm1398, %v1407, %v1403
    %v1409 = vsel %vm1112, %v1408, %v1399
    %v1411 = vsel %vm1384, %v1409, -1e+30
    %vm1412 = vcmask 123904
    %v1413 = vsel %vm1412, %v1411, -inf
    %1414 = vmax.xlane.f32.xlu0 %v1413
    %v1415 = vpop.xlane.xlu0 %1414
    %v1416 = vsub.f32 %v1411, %v1415
    %v1417 = vmul.f32 %v1416, 1.442695
    %v1418 = vpow.pop %v1417
    %v1419 = vsel %vm1412, %v1418, 0.0
    %1420 = vadd.xlane.f32.xlu0 %v1419
    %v1421 = vpop.xlane.xlu0 %1420
    %v1422 = vrcp.pop %v1421
    %v1423 = vmul.f32 %v1418, %v1422
    %v1424 = vlaneseq
    %v1425 = vshrl.u32 %v1424, 7
    %v1426 = vsub.s32 0, %v1425
    %v1427 = vrot.slane %v1423, %v1426
    %1429 = vbcast.lane.b32.xlu0 %v1427, 256
    %v1430 = vpop.permute.xlu0 %1429
    %s1432 = sor.u32 256, 8
    %1433 = vbcast.lane.b32.xlu0 %v1427, %s1432
    %v1434 = vpop.permute.xlu0 %1433
    %v1435 = vlaneseq
    %v1436 = vshrl.u32 %v1435, 7
    %v1437 = vsub.s32 1, %v1436
    %v1438 = vrot.slane %v1423, %v1437
    %1440 = vbcast.lane.b32.xlu0 %v1438, 256
    %v1441 = vpop.permute.xlu0 %1440
    %s1443 = sor.u32 256, 8
    %1444 = vbcast.lane.b32.xlu0 %v1438, %s1443
    %v1445 = vpop.permute.xlu0 %1444
    %v1446 = vmul.f32 %v1430, %v1206
    %v1447 = vmul.f32 %v1434, %v1207
    %v1448 = vmul.f32 %v1441, %v1208
    %v1449 = vmul.f32 %v1445, %v1209
    %v1450 = vadd.f32 %v1446, %v1447
    %v1451 = vrot.slane %v1450, 4
    %v1452 = vadd.f32 %v1450, %v1451
    %v1453 = vrot.slane %v1452, 2
    %v1454 = vadd.f32 %v1452, %v1453
    %v1455 = vrot.slane %v1454, 1
    %v1456 = vadd.f32 %v1454, %v1455
    %v1457 = vadd.f32 %v1448, %v1449
    %v1458 = vrot.slane %v1457, 4
    %v1459 = vadd.f32 %v1457, %v1458
    %v1460 = vrot.slane %v1459, 2
    %v1461 = vadd.f32 %v1459, %v1460
    %v1462 = vrot.slane %v1461, 1
    %v1463 = vadd.f32 %v1461, %v1462
    %v1466 = vsel %vm1112, %v1463, %v1456
    %1468 = vst [vmem:[#allocation4] sm:$0x3] %v1466
    // Predicated region
    $region46: #{_fused_forward.1} parent=1 // pred_check
      _
    $region47: #{_fused_forward.1} parent=1 // pred_check_branch
      %1470 = sbr.rel (0) target = $region49
    $region48: #{_fused_forward.1} parent=1 // pred_region
      %s1472 = ssub.s32 32, 32
      %1473 = vsyncadd [#allocation3], %s1472
      %s1475 = sshll.u32 [#allocation2], 4
      %s1476 = int_to_ptr.vmem [resolvable:$true] %s1475
      %1478 = dma.vmem_to_hbm [thread:$0]  %s1476, 32, %s11, [#allocation3]
    $region49: #{_fused_forward.1} parent=1 // pred_fallthru
      _
    // Predicated region
    $region50: #{_fused_forward.1} parent=1 // pred_check
      _
    $region51: #{_fused_forward.1} parent=1 // pred_check_branch
      %1480 = sbr.rel (0) target = $region53
    $region52: #{_fused_forward.1} parent=1 // pred_region
      %s1482 = ssub.s32 32, 32
      %1483 = vsyncadd [#allocation5], %s1482
      %s1485 = sshll.u32 [#allocation4], 4
      %s1486 = int_to_ptr.vmem [resolvable:$true] %s1485
      %1488 = dma.vmem_to_hbm [thread:$0]  %s1486, 32, %s12, [#allocation5]
    $region53: #{_fused_forward.1} parent=1 // pred_fallthru
      _
    // Predicated region
    $region54: #{_fused_forward.1} parent=1 // pred_check
      _
    $region55: #{_fused_forward.1} parent=1 // pred_check_branch
      %1490 = sbr.rel (0) target = $region57
    $region56: #{_fused_forward.1} parent=1 // pred_region
      %1491 = dma.done [#allocation3], 32
    $region57: #{_fused_forward.1} parent=1 // pred_fallthru
      _
    // Predicated region
    $region58: #{_fused_forward.1} parent=1 // pred_check
      _
    $region59: #{_fused_forward.1} parent=1 // pred_check_branch
      %1493 = sbr.rel (0) target = $region61
    $region60: #{_fused_forward.1} parent=1 // pred_region
      %1494 = dma.done [#allocation5], 32
    $region61: #{_fused_forward.1} parent=1 // pred_fallthru
      _
    %1495 = vsyncpa [#allocation3], 1
    %1496 = vsyncpa [#allocation5], 1

</llo_original>
